<compile_context>
chip_gen: v7x
topology: tpu7x:2x2x1
jax: 0.10.0
libtpu: 0.0.40
codegen_flags: <defaults>
</compile_context>

<pallas_src>
import numpy as np
import jax
import jax.numpy as jnp
from jax import lax
from jax.experimental import pallas as pl
from jax.experimental.pallas import tpu as pltpu

BN_EPS = 1e-5


# ------------------------------------------------------------------- kernels --

def _make_stage1_kernel(k, p, W, THW, compute_dtype):
    """Branch ConvTranspose2d(k, stride=1, pad=p) + bias on one row tile.

    x_ref is the halo'd flat row tile (C_in, LT); the k*k taps are static lane-slices
    of it (row halo handled by the wrapper's zero pad, column halo by an in-kernel
    mask).  Also emits per-tile per-channel (sum, sum_sq) partial BN stats (f32)."""

    def kernel(w_ref, b_ref, x_ref, y_ref, stats_ref):
        # Column index of every output position inside its image row.  Tiles cover whole
        # rows, so this is independent of the grid position.
        col = lax.broadcasted_iota(jnp.int32, (1, THW), 1) % W
        acc = None
        for di in range(-p, p + 1):
            for dj in range(-p, p + 1):
                start = (di + p) * W + (dj + p)            # static lane offset
                xs = x_ref[:, pl.ds(start, THW)].astype(compute_dtype)
                if dj != 0:
                    valid = jnp.logical_and(col + dj >= 0, col + dj < W)
                    xs = jnp.where(valid, xs, jnp.zeros_like(xs))
                t = (di + p) * k + (dj + p)
                part = jnp.dot(w_ref[t], xs, preferred_element_type=jnp.float32)
                acc = part if acc is None else acc + part
        y = acc + b_ref[...]                               # f32
        y_ref[...] = y.astype(y_ref.dtype)                 # bf16 storage by default
        stats_ref[:, 0:1] = jnp.sum(y, axis=1, keepdims=True)
        stats_ref[:, 1:2] = jnp.sum(y * y, axis=1, keepdims=True)

    return kernel


def _make_stage2_kernel(n_skip, compute_dtype):
    """Fused: branch BN(affine)+ReLU -> dim_reduc 1x1 ConvTranspose (no bias) over the
    channel-concat [skip prev layers ..., branch out] -> ReLU -> partial BN stats.
    Each skip layer is its own input (no HBM concat)."""

    def kernel(*refs):
        y_ref, sc_ref, sh_ref, w2h_ref = refs[:4]
        skip_refs = refs[4:4 + n_skip]
        w2s_refs = refs[4 + n_skip:4 + 2 * n_skip]
        r_ref = refs[4 + 2 * n_skip]
        stats_ref = refs[5 + 2 * n_skip]

        h = jnp.maximum(sc_ref[...] * y_ref[...].astype(jnp.float32) + sh_ref[...], 0.0)
        z = jnp.dot(w2h_ref[...], h.astype(compute_dtype),
                    preferred_element_type=jnp.float32)
        for s_ref, w_ref in zip(skip_refs, w2s_refs):
            z = z + jnp.dot(w_ref[...], s_ref[...].astype(compute_dtype),
                            preferred_element_type=jnp.float32)
        r = jnp.maximum(z, 0.0)
        r_ref[...] = r.astype(r_ref.dtype)
        stats_ref[:, 0:1] = jnp.sum(r, axis=1, keepdims=True)
        stats_ref[:, 1:2] = jnp.sum(r * r, axis=1, keepdims=True)

    return kernel


def _bn_affine_kernel(r_ref, sc_ref, sh_ref, o_ref):
    """Final dim_reduc BatchNorm (its ReLU already ran in stage 2)."""
    o_ref[...] = (sc_ref[...] * r_ref[...].astype(jnp.float32)
                  + sh_ref[...]).astype(o_ref.dtype)


# ------------------------------------------------------------------- helpers --

def _round_up(x, m):
    return (x + m - 1) // m * m


def _pick_row_tile(H, W, bytes_per_pixel, budget_bytes=12 * 1024 * 1024):
    """Largest legal row tile TH (TH | H and TH*W % 128 == 0, or TH == H) whose
    double-buffered, all-stage working set fits the VMEM budget."""
    legal = [th for th in range(1, H + 1)
             if H % th == 0 and (th == H or (th * W) % 128 == 0)]
    fitting = [th for th in legal if th * W * bytes_per_pixel <= budget_bytes]
    return max(fitting) if fitting else min(legal)


def _bn_scale_shift(stats, count, gamma, beta):
    """Per-tile partial (sum, sum_sq) -> training-mode BatchNorm scale/shift
    (biased variance, matching PyTorch's train-mode normalization).
    NOTE: one-pass E[y^2]-E[y]^2 in f32; fine for typical BN magnitudes."""
    tot = jnp.sum(stats, axis=(0, 1))                     # (C, 2)
    mean = tot[:, 0] / count
    var = jnp.maximum(tot[:, 1] / count - mean * mean, 0.0)
    scale = gamma * lax.rsqrt(var + BN_EPS)
    shift = beta - mean * scale
    return (scale.reshape(-1, 1).astype(jnp.float32),
            shift.reshape(-1, 1).astype(jnp.float32))


# ------------------------------------------------------------------- wrapper --

def gfixed_layer2_forward(x, prev_layers, params, *, kernel_size, skip_indices,
                          compute_dtype=jnp.bfloat16):
    """x: (N, C_in, H, W) f32.  prev_layers: tuple of (N, C_in, H, W) f32.  params:
       w1 (C_in, C_out, k, k), b1/gamma1/beta1 (C_out,), w2 (C_cat, C_out, 1, 1),
       gamma2/beta2 (C_out,).  Returns (N, C_out, H, W) f32.
       compute_dtype controls the MXU operand streams and the inter-stage storage."""
    N, C_in, H, W = x.shape
    k = int(kernel_size)
    p = (k - 1) // 2
    C1 = params["w1"].shape[1]       # branch out channels
    C2 = params["w2"].shape[1]       # dim_reduc out channels
    HW = H * W
    skip_ids = [i for i, s in enumerate(skip_indices) if int(s) == 1]
    n_skip = len(skip_ids)
    assert params["w2"].shape[0] == n_skip * C_in + C1
    cesz = np.dtype(compute_dtype).itemsize
    store_dtype = compute_dtype      # inter-stage y1 / r storage (stats stay f32)

    # ---- row tile sized against the max working set of all three stages ------------
    bpp = 2 * max(C_in * cesz + C1 * cesz,                       # stage 1
                  C1 * cesz + n_skip * C_in * 4 + C2 * cesz,     # stage 2
                  C2 * cesz + C2 * 4)                            # stage 3
    TH = _pick_row_tile(H, W, bpp)
    nt = H // TH
    THW = TH * W
    halo = p * W + p
    LT = _round_up(THW + 2 * halo, 128)                          # lane-padded tile len

    # ---- input: zero-pad rows + halo row tiles, cast in the same (already needed) pass
    total = (nt - 1) * THW + LT
    x_flat = x.reshape(N, C_in, HW).astype(compute_dtype)
    x_pad = jnp.pad(x_flat, ((0, 0), (0, 0), (halo, total - halo - HW)))
    if nt == 1:
        x_tiles = x_pad[:, None, :, :]                           # (N, 1, C_in, LT)
    else:
        x_tiles = jnp.stack([x_pad[:, :, j * THW:j * THW + LT] for j in range(nt)],
                            axis=1)                              # (N, nt, C_in, LT)

    # ConvTranspose2d(stride=1, pad=p) == cross-correlation with the spatially flipped
    # kernel and swapped in/out channels: W_tap[t, co, ci] = w1[ci, co, p-di, p-dj].
    w_taps = jnp.transpose(params["w1"][:, :, ::-1, ::-1], (2, 3, 1, 0))
    w_taps = w_taps.reshape(k * k, C1, C_in).astype(compute_dtype)
    b1 = params["b1"].reshape(C1, 1).astype(jnp.float32)

    grid = (N, nt)
    cparams = pltpu.CompilerParams(
        dimension_semantics=("parallel", "parallel"),
        vmem_limit_bytes=32 * 1024 * 1024)

    # ---- stage 1: branch deconv (k*k shifted-slice dots) + bias + partial BN stats --
    y1, st1 = pl.pallas_call(
        _make_stage1_kernel(k, p, W, THW, compute_dtype),
        out_shape=(jax.ShapeDtypeStruct((N, C1, HW), store_dtype),
                   jax.ShapeDtypeStruct((N, nt, C1, 2), jnp.float32)),
        grid=grid,
        in_specs=[
            pl.BlockSpec((k * k, C1, C_in), lambda n, j: (0, 0, 0)),   # taps (resident)
            pl.BlockSpec((C1, 1), lambda n, j: (0, 0)),                # bias
            pl.BlockSpec((None, None, C_in, LT), lambda n, j: (n, j, 0, 0)),
        ],
        out_specs=(
            pl.BlockSpec((None, C1, THW), lambda n, j: (n, 0, j)),     # lane-dense
            pl.BlockSpec((None, None, C1, 2), lambda n, j: (n, j, 0, 0)),
        ),
        compiler_params=cparams,
    )(w_taps, b1, x_tiles)

    scale1, shift1 = _bn_scale_shift(st1, N * HW, params["gamma1"], params["beta1"])

    # ---- stage 2: BN1 affine + ReLU -> 1x1 deconv over [skips..., h] -> ReLU + stats -
    w2_t = params["w2"][:, :, 0, 0].T                       # (C2, C_cat), cat=[skips..,h]
    w2_h = w2_t[:, n_skip * C_in:].astype(compute_dtype)    # (C2, C1)

    args2 = [y1, scale1, shift1, w2_h]
    in_specs2 = [
        pl.BlockSpec((None, C1, THW), lambda n, j: (n, 0, j)),
        pl.BlockSpec((C1, 1), lambda n, j: (0, 0)),
        pl.BlockSpec((C1, 1), lambda n, j: (0, 0)),
        pl.BlockSpec((C2, C1), lambda n, j: (0, 0)),
    ]
    for i in skip_ids:                                      # skip layers: f32, no concat
        args2.append(prev_layers[i].reshape(N, C_in, HW))
        in_specs2.append(pl.BlockSpec((None, C_in, THW), lambda n, j: (n, 0, j)))
    for s_pos in range(n_skip):                             # matching w2 column slices
        args2.append(w2_t[:, s_pos * C_in:(s_pos + 1) * C_in].astype(compute_dtype))
        in_specs2.append(pl.BlockSpec((C2, C_in), lambda n, j: (0, 0)))

    r, st2 = pl.pallas_call(
        _make_stage2_kernel(n_skip, compute_dtype),
        out_shape=(jax.ShapeDtypeStruct((N, C2, HW), store_dtype),
                   jax.ShapeDtypeStruct((N, nt, C2, 2), jnp.float32)),
        grid=grid,
        in_specs=in_specs2,
        out_specs=(
            pl.BlockSpec((None, C2, THW), lambda n, j: (n, 0, j)),
            pl.BlockSpec((None, None, C2, 2), lambda n, j: (n, j, 0, 0)),
        ),
        compiler_params=cparams,
    )(*args2)

    scale2, shift2 = _bn_scale_shift(st2, N * HW, params["gamma2"], params["beta2"])

    # ---- stage 3: final dim_reduc BatchNorm affine -----------------------------------
    out = pl.pallas_call(
        _bn_affine_kernel,
        out_shape=jax.ShapeDtypeStruct((N, C2, HW), jnp.float32),
        grid=grid,
        in_specs=[
            pl.BlockSpec((None, C2, THW), lambda n, j: (n, 0, j)),
            pl.BlockSpec((C2, 1), lambda n, j: (0, 0)),
            pl.BlockSpec((C2, 1), lambda n, j: (0, 0)),
        ],
        out_specs=pl.BlockSpec((None, C2, THW), lambda n, j: (n, 0, j)),
        compiler_params=cparams,
    )(r, scale2, shift2)

    return out.reshape(N, C2, H, W)


# ----------------------------------------------------------------- reference --

def _bn_train_ref(y, gamma, beta):
    mean = jnp.mean(y, axis=(0, 2, 3), keepdims=True)
    var = jnp.mean((y - mean) ** 2, axis=(0, 2, 3), keepdims=True)
    return (gamma[None, :, None, None] * (y - mean) * lax.rsqrt(var + BN_EPS)
            + beta[None, :, None, None])


def gfixed_layer2_reference(x, prev_layers, params, *, kernel_size, skip_indices):
    """Pure-JAX reference of the PyTorch GFixedLayer2 forward (training-mode BN)."""
    k = int(kernel_size)
    p = (k - 1) // 2
    w_oihw = jnp.transpose(params["w1"][:, :, ::-1, ::-1], (1, 0, 2, 3))
    y = lax.conv_general_dilated(x, w_oihw, (1, 1), ((p, p), (p, p)),
                                 dimension_numbers=("NCHW", "OIHW", "NCHW"))
    y = y + params["b1"][None, :, None, None]
    h = jnp.maximum(_bn_train_ref(y, params["gamma1"], params["beta1"]), 0.0)
    cat = [prev_layers[i] for i, s in enumerate(skip_indices) if int(s) == 1] + [h]
    cat = jnp.concatenate(cat, axis=1)
    z = jnp.einsum("nchw,co->nohw", cat, params["w2"][:, :, 0, 0])
    r = jnp.maximum(z, 0.0)
    return _bn_train_ref(r, params["gamma2"], params["beta2"])


if __name__ == "__main__":
    key = jax.random.PRNGKey(0)
    ks = jax.random.split(key, 9)

    # GFixedLayer2 with layer_id=1, sample_arc = (layer_type=0 -> 3x3 deconv, skips=(1,)).
    # The module's channel bookkeeping implies out_planes == in_planes.
    N, C, H, W = 2, 8, 16, 16
    layer_id = 1
    sample_arc = (0, (1,))
    layer_type = sample_arc[0]
    kernel_size = 3 if layer_type == 0 else 5
    skip_indices = sample_arc[1] if layer_id > 0 else (0,)
    n_skip = int(sum(skip_indices))
    c_cat = (n_skip + 1) * C

    x = jax.random.normal(ks[0], (N, C, H, W), jnp.float32)
    prev_layers = tuple(
        jax.random.normal(jax.random.fold_in(ks[1], i), (N, C, H, W), jnp.float32)
        for i in range(len(skip_indices)))

    bound1 = 1.0 / np.sqrt(C * kernel_size * kernel_size)
    bound2 = 1.0 / np.sqrt(c_cat)
    params = dict(
        w1=jax.random.uniform(ks[2], (C, C, kernel_size, kernel_size), jnp.float32,
                              -bound1, bound1),
        b1=jax.random.uniform(ks[3], (C,), jnp.float32, -bound1, bound1),
        gamma1=1.0 + 0.1 * jax.random.normal(ks[4], (C,), jnp.float32),
        beta1=0.1 * jax.random.normal(ks[5], (C,), jnp.float32),
        w2=jax.random.uniform(ks[6], (c_cat, C, 1, 1), jnp.float32, -bound2, bound2),
        gamma2=1.0 + 0.1 * jax.random.normal(ks[7], (C,), jnp.float32),
        beta2=0.1 * jax.random.normal(ks[8], (C,), jnp.float32),
    )

    fwd = jax.jit(gfixed_layer2_forward,
                  static_argnames=("kernel_size", "skip_indices", "compute_dtype"))

    ref = gfixed_layer2_reference(x, prev_layers, params,
                                  kernel_size=kernel_size, skip_indices=skip_indices)

    # f32 path: exact algorithmic check against the f32 reference.
    out_f32 = fwd(x, prev_layers, params, kernel_size=kernel_size,
                  skip_indices=skip_indices, compute_dtype=jnp.float32)
    out_f32 = jax.block_until_ready(out_f32)
    np.testing.assert_allclose(np.asarray(out_f32), np.asarray(ref),
                               rtol=1e-4, atol=1e-4)

    # default bf16 path (bf16 operand streams + bf16 inter-stage storage): looser tol.
    out_bf16 = fwd(x, prev_layers, params, kernel_size=kernel_size,
                   skip_indices=skip_indices)
    out_bf16 = jax.block_until_ready(out_bf16)
    np.testing.assert_allclose(np.asarray(out_bf16), np.asarray(ref),
                               rtol=5e-2, atol=5e-2)

    print("KERNEL_OK")
</pallas_src>

<mosaic_0001>
module attributes {stable_mosaic.version = 11 : i64} {
  func.func @kernel(%arg0: i32, %arg1: i32, %arg2: memref<9x8x8xf32, #tpu.memory_space<vmem>>, %arg3: memref<8x1xf32, #tpu.memory_space<vmem>>, %arg4: memref<1x1x8x384xf32, #tpu.memory_space<vmem>>, %arg5: memref<1x8x256xf32, #tpu.memory_space<vmem>>, %arg6: memref<1x1x8x2xf32, #tpu.memory_space<vmem>>) attributes {dimension_semantics = [#tpu.dimension_semantics<parallel>, #tpu.dimension_semantics<parallel>], iteration_bounds = array<i64: 2, 1>, scalar_prefetch = 0 : i64, scratch_operands = 0 : i64, tpu.core_type = #tpu.core_type<tc>, window_params = [{pipeline_mode = #tpu.pipeline_mode<synchronous>, transform_indices = @transform_0, window_bounds = array<i64: 9, 8, 8>}, {pipeline_mode = #tpu.pipeline_mode<synchronous>, transform_indices = @transform_1, window_bounds = array<i64: 8, 1>}, {transform_indices = @transform_2, window_bounds = array<i64: 1, 1, 8, 384>}, {transform_indices = @transform_3, window_bounds = array<i64: 1, 8, 256>}, {transform_indices = @transform_4, window_bounds = array<i64: 1, 1, 8, 2>}]} {
    %0 = tpu.iota {dimensions = array<i32: 1>} : vector<1x256xi32>
    %c16_i32 = arith.constant 16 : i32
    %c0_i32 = arith.constant 0 : i32
    %1 = arith.cmpi eq, %c16_i32, %c0_i32 : i32
    %c1_i32 = arith.constant 1 : i32
    %2 = arith.select %1, %c1_i32, %c16_i32 : i32
    %3 = vector.broadcast %2 : i32 to vector<1x256xi32>
    %4 = arith.remsi %0, %3 : vector<1x256xi32>
    %c0_i32_0 = arith.constant 0 : i32
    %5 = vector.broadcast %c0_i32_0 : i32 to vector<1x256xi32>
    %6 = arith.cmpi ne, %4, %5 : vector<1x256xi32>
    %c0_i32_1 = arith.constant 0 : i32
    %7 = vector.broadcast %c0_i32_1 : i32 to vector<1x256xi32>
    %8 = arith.cmpi slt, %4, %7 : vector<1x256xi32>
    %c0_i32_2 = arith.constant 0 : i32
    %9 = arith.cmpi slt, %2, %c0_i32_2 : i32
    %10 = vector.broadcast %9 : i1 to vector<1x256xi1>
    %11 = vector.broadcast %10 : vector<1x256xi1> to vector<1x256xi1>
    %12 = arith.xori %8, %11 : vector<1x256xi1>
    %13 = arith.andi %12, %6 : vector<1x256xi1>
    %14 = vector.broadcast %2 : i32 to vector<1x256xi32>
    %15 = arith.addi %4, %14 : vector<1x256xi32>
    %16 = arith.select %13, %15, %4 : vector<1x256xi1>, vector<1x256xi32>
    %c0 = arith.constant 0 : index
    %c0_3 = arith.constant 0 : index
    %c0_4 = arith.constant 0 : index
    %c0_5 = arith.constant 0 : index
    %17 = vector.load %arg4[%c0, %c0_3, %c0_4, %c0_5] : memref<1x1x8x384xf32, #tpu.memory_space<vmem>>, vector<1x1x8x256xf32>
    %18 = vector.shape_cast %17 : vector<1x1x8x256xf32> to vector<8x256xf32>
    %c-1_i32 = arith.constant -1 : i32
    %19 = vector.broadcast %c-1_i32 : i32 to vector<1x256xi32>
    %20 = arith.addi %16, %19 : vector<1x256xi32>
    %c0_i32_6 = arith.constant 0 : i32
    %21 = vector.broadcast %c0_i32_6 : i32 to vector<1x256xi32>
    %22 = arith.cmpi sge, %20, %21 : vector<1x256xi32>
    %c-1_i32_7 = arith.constant -1 : i32
    %23 = vector.broadcast %c-1_i32_7 : i32 to vector<1x256xi32>
    %24 = arith.addi %16, %23 : vector<1x256xi32>
    %c16_i32_8 = arith.constant 16 : i32
    %25 = vector.broadcast %c16_i32_8 : i32 to vector<1x256xi32>
    %26 = arith.cmpi slt, %24, %25 : vector<1x256xi32>
    %27 = arith.andi %22, %26 : vector<1x256xi1>
    %cst = arith.constant 0.000000e+00 : f32
    %28 = vector.broadcast %cst : f32 to vector<8x256xf32>
    %29 = vector.shape_cast %27 : vector<1x256xi1> to vector<1x256xi1>
    %30 = vector.broadcast %29 : vector<1x256xi1> to vector<8x256xi1>
    %31 = arith.select %30, %18, %28 : vector<8x256xi1>, vector<8x256xf32>
    %c0_9 = arith.constant 0 : index
    %c0_10 = arith.constant 0 : index
    %c0_11 = arith.constant 0 : index
    %32 = vector.load %arg2[%c0_9, %c0_10, %c0_11] : memref<9x8x8xf32, #tpu.memory_space<vmem>>, vector<1x8x8xf32>
    %33 = vector.shape_cast %32 : vector<1x8x8xf32> to vector<8x8xf32>
    %cst_12 = arith.constant dense<0.000000e+00> : vector<8x256xf32>
    %34 = tpu.matmul %33, %31, %cst_12 {dimension_numbers = #tpu.dot_dimension_numbers<[1], [0], [0], [1], [0, 0, 1, 1], [], []>} : vector<8x8xf32>, vector<8x256xf32>, vector<8x256xf32> -> vector<8x256xf32>
    %c0_13 = arith.constant 0 : index
    %c0_14 = arith.constant 0 : index
    %c0_15 = arith.constant 0 : index
    %c1 = arith.constant 1 : index
    %35 = vector.load %arg4[%c0_13, %c0_14, %c0_15, %c1] : memref<1x1x8x384xf32, #tpu.memory_space<vmem>>, vector<1x1x8x256xf32>
    %36 = vector.shape_cast %35 : vector<1x1x8x256xf32> to vector<8x256xf32>
    %c1_16 = arith.constant 1 : index
    %c0_17 = arith.constant 0 : index
    %c0_18 = arith.constant 0 : index
    %37 = vector.load %arg2[%c1_16, %c0_17, %c0_18] : memref<9x8x8xf32, #tpu.memory_space<vmem>>, vector<1x8x8xf32>
    %38 = vector.shape_cast %37 : vector<1x8x8xf32> to vector<8x8xf32>
    %cst_19 = arith.constant dense<0.000000e+00> : vector<8x256xf32>
    %39 = tpu.matmul %38, %36, %cst_19 {dimension_numbers = #tpu.dot_dimension_numbers<[1], [0], [0], [1], [0, 0, 1, 1], [], []>} : vector<8x8xf32>, vector<8x256xf32>, vector<8x256xf32> -> vector<8x256xf32>
    %40 = arith.addf %34, %39 : vector<8x256xf32>
    %c0_20 = arith.constant 0 : index
    %c0_21 = arith.constant 0 : index
    %c0_22 = arith.constant 0 : index
    %c2 = arith.constant 2 : index
    %41 = vector.load %arg4[%c0_20, %c0_21, %c0_22, %c2] : memref<1x1x8x384xf32, #tpu.memory_space<vmem>>, vector<1x1x8x256xf32>
    %42 = vector.shape_cast %41 : vector<1x1x8x256xf32> to vector<8x256xf32>
    %c1_i32_23 = arith.constant 1 : i32
    %43 = vector.broadcast %c1_i32_23 : i32 to vector<1x256xi32>
    %44 = arith.addi %16, %43 : vector<1x256xi32>
    %c0_i32_24 = arith.constant 0 : i32
    %45 = vector.broadcast %c0_i32_24 : i32 to vector<1x256xi32>
    %46 = arith.cmpi sge, %44, %45 : vector<1x256xi32>
    %c1_i32_25 = arith.constant 1 : i32
    %47 = vector.broadcast %c1_i32_25 : i32 to vector<1x256xi32>
    %48 = arith.addi %16, %47 : vector<1x256xi32>
    %c16_i32_26 = arith.constant 16 : i32
    %49 = vector.broadcast %c16_i32_26 : i32 to vector<1x256xi32>
    %50 = arith.cmpi slt, %48, %49 : vector<1x256xi32>
    %51 = arith.andi %46, %50 : vector<1x256xi1>
    %cst_27 = arith.constant 0.000000e+00 : f32
    %52 = vector.broadcast %cst_27 : f32 to vector<8x256xf32>
    %53 = vector.shape_cast %51 : vector<1x256xi1> to vector<1x256xi1>
    %54 = vector.broadcast %53 : vector<1x256xi1> to vector<8x256xi1>
    %55 = arith.select %54, %42, %52 : vector<8x256xi1>, vector<8x256xf32>
    %c2_28 = arith.constant 2 : index
    %c0_29 = arith.constant 0 : index
    %c0_30 = arith.constant 0 : index
    %56 = vector.load %arg2[%c2_28, %c0_29, %c0_30] : memref<9x8x8xf32, #tpu.memory_space<vmem>>, vector<1x8x8xf32>
    %57 = vector.shape_cast %56 : vector<1x8x8xf32> to vector<8x8xf32>
    %cst_31 = arith.constant dense<0.000000e+00> : vector<8x256xf32>
    %58 = tpu.matmul %57, %55, %cst_31 {dimension_numbers = #tpu.dot_dimension_numbers<[1], [0], [0], [1], [0, 0, 1, 1], [], []>} : vector<8x8xf32>, vector<8x256xf32>, vector<8x256xf32> -> vector<8x256xf32>
    %59 = arith.addf %40, %58 : vector<8x256xf32>
    %c0_32 = arith.constant 0 : index
    %c0_33 = arith.constant 0 : index
    %c0_34 = arith.constant 0 : index
    %c16 = arith.constant 16 : index
    %60 = vector.load %arg4[%c0_32, %c0_33, %c0_34, %c16] : memref<1x1x8x384xf32, #tpu.memory_space<vmem>>, vector<1x1x8x256xf32>
    %61 = vector.shape_cast %60 : vector<1x1x8x256xf32> to vector<8x256xf32>
    %c-1_i32_35 = arith.constant -1 : i32
    %62 = vector.broadcast %c-1_i32_35 : i32 to vector<1x256xi32>
    %63 = arith.addi %16, %62 : vector<1x256xi32>
    %c0_i32_36 = arith.constant 0 : i32
    %64 = vector.broadcast %c0_i32_36 : i32 to vector<1x256xi32>
    %65 = arith.cmpi sge, %63, %64 : vector<1x256xi32>
    %c-1_i32_37 = arith.constant -1 : i32
    %66 = vector.broadcast %c-1_i32_37 : i32 to vector<1x256xi32>
    %67 = arith.addi %16, %66 : vector<1x256xi32>
    %c16_i32_38 = arith.constant 16 : i32
    %68 = vector.broadcast %c16_i32_38 : i32 to vector<1x256xi32>
    %69 = arith.cmpi slt, %67, %68 : vector<1x256xi32>
    %70 = arith.andi %65, %69 : vector<1x256xi1>
    %cst_39 = arith.constant 0.000000e+00 : f32
    %71 = vector.broadcast %cst_39 : f32 to vector<8x256xf32>
    %72 = vector.shape_cast %70 : vector<1x256xi1> to vector<1x256xi1>
    %73 = vector.broadcast %72 : vector<1x256xi1> to vector<8x256xi1>
    %74 = arith.select %73, %61, %71 : vector<8x256xi1>, vector<8x256xf32>
    %c3 = arith.constant 3 : index
    %c0_40 = arith.constant 0 : index
    %c0_41 = arith.constant 0 : index
    %75 = vector.load %arg2[%c3, %c0_40, %c0_41] : memref<9x8x8xf32, #tpu.memory_space<vmem>>, vector<1x8x8xf32>
    %76 = vector.shape_cast %75 : vector<1x8x8xf32> to vector<8x8xf32>
    %cst_42 = arith.constant dense<0.000000e+00> : vector<8x256xf32>
    %77 = tpu.matmul %76, %74, %cst_42 {dimension_numbers = #tpu.dot_dimension_numbers<[1], [0], [0], [1], [0, 0, 1, 1], [], []>} : vector<8x8xf32>, vector<8x256xf32>, vector<8x256xf32> -> vector<8x256xf32>
    %78 = arith.addf %59, %77 : vector<8x256xf32>
    %c0_43 = arith.constant 0 : index
    %c0_44 = arith.constant 0 : index
    %c0_45 = arith.constant 0 : index
    %c17 = arith.constant 17 : index
    %79 = vector.load %arg4[%c0_43, %c0_44, %c0_45, %c17] : memref<1x1x8x384xf32, #tpu.memory_space<vmem>>, vector<1x1x8x256xf32>
    %80 = vector.shape_cast %79 : vector<1x1x8x256xf32> to vector<8x256xf32>
    %c4 = arith.constant 4 : index
    %c0_46 = arith.constant 0 : index
    %c0_47 = arith.constant 0 : index
    %81 = vector.load %arg2[%c4, %c0_46, %c0_47] : memref<9x8x8xf32, #tpu.memory_space<vmem>>, vector<1x8x8xf32>
    %82 = vector.shape_cast %81 : vector<1x8x8xf32> to vector<8x8xf32>
    %cst_48 = arith.constant dense<0.000000e+00> : vector<8x256xf32>
    %83 = tpu.matmul %82, %80, %cst_48 {dimension_numbers = #tpu.dot_dimension_numbers<[1], [0], [0], [1], [0, 0, 1, 1], [], []>} : vector<8x8xf32>, vector<8x256xf32>, vector<8x256xf32> -> vector<8x256xf32>
    %84 = arith.addf %78, %83 : vector<8x256xf32>
    %c0_49 = arith.constant 0 : index
    %c0_50 = arith.constant 0 : index
    %c0_51 = arith.constant 0 : index
    %c18 = arith.constant 18 : index
    %85 = vector.load %arg4[%c0_49, %c0_50, %c0_51, %c18] : memref<1x1x8x384xf32, #tpu.memory_space<vmem>>, vector<1x1x8x256xf32>
    %86 = vector.shape_cast %85 : vector<1x1x8x256xf32> to vector<8x256xf32>
    %c1_i32_52 = arith.constant 1 : i32
    %87 = vector.broadcast %c1_i32_52 : i32 to vector<1x256xi32>
    %88 = arith.addi %16, %87 : vector<1x256xi32>
    %c0_i32_53 = arith.constant 0 : i32
    %89 = vector.broadcast %c0_i32_53 : i32 to vector<1x256xi32>
    %90 = arith.cmpi sge, %88, %89 : vector<1x256xi32>
    %c1_i32_54 = arith.constant 1 : i32
    %91 = vector.broadcast %c1_i32_54 : i32 to vector<1x256xi32>
    %92 = arith.addi %16, %91 : vector<1x256xi32>
    %c16_i32_55 = arith.constant 16 : i32
    %93 = vector.broadcast %c16_i32_55 : i32 to vector<1x256xi32>
    %94 = arith.cmpi slt, %92, %93 : vector<1x256xi32>
    %95 = arith.andi %90, %94 : vector<1x256xi1>
    %cst_56 = arith.constant 0.000000e+00 : f32
    %96 = vector.broadcast %cst_56 : f32 to vector<8x256xf32>
    %97 = vector.shape_cast %95 : vector<1x256xi1> to vector<1x256xi1>
    %98 = vector.broadcast %97 : vector<1x256xi1> to vector<8x256xi1>
    %99 = arith.select %98, %86, %96 : vector<8x256xi1>, vector<8x256xf32>
    %c5 = arith.constant 5 : index
    %c0_57 = arith.constant 0 : index
    %c0_58 = arith.constant 0 : index
    %100 = vector.load %arg2[%c5, %c0_57, %c0_58] : memref<9x8x8xf32, #tpu.memory_space<vmem>>, vector<1x8x8xf32>
    %101 = vector.shape_cast %100 : vector<1x8x8xf32> to vector<8x8xf32>
    %cst_59 = arith.constant dense<0.000000e+00> : vector<8x256xf32>
    %102 = tpu.matmul %101, %99, %cst_59 {dimension_numbers = #tpu.dot_dimension_numbers<[1], [0], [0], [1], [0, 0, 1, 1], [], []>} : vector<8x8xf32>, vector<8x256xf32>, vector<8x256xf32> -> vector<8x256xf32>
    %103 = arith.addf %84, %102 : vector<8x256xf32>
    %c0_60 = arith.constant 0 : index
    %c0_61 = arith.constant 0 : index
    %c0_62 = arith.constant 0 : index
    %c32 = arith.constant 32 : index
    %104 = vector.load %arg4[%c0_60, %c0_61, %c0_62, %c32] : memref<1x1x8x384xf32, #tpu.memory_space<vmem>>, vector<1x1x8x256xf32>
    %105 = vector.shape_cast %104 : vector<1x1x8x256xf32> to vector<8x256xf32>
    %c-1_i32_63 = arith.constant -1 : i32
    %106 = vector.broadcast %c-1_i32_63 : i32 to vector<1x256xi32>
    %107 = arith.addi %16, %106 : vector<1x256xi32>
    %c0_i32_64 = arith.constant 0 : i32
    %108 = vector.broadcast %c0_i32_64 : i32 to vector<1x256xi32>
    %109 = arith.cmpi sge, %107, %108 : vector<1x256xi32>
    %c-1_i32_65 = arith.constant -1 : i32
    %110 = vector.broadcast %c-1_i32_65 : i32 to vector<1x256xi32>
    %111 = arith.addi %16, %110 : vector<1x256xi32>
    %c16_i32_66 = arith.constant 16 : i32
    %112 = vector.broadcast %c16_i32_66 : i32 to vector<1x256xi32>
    %113 = arith.cmpi slt, %111, %112 : vector<1x256xi32>
    %114 = arith.andi %109, %113 : vector<1x256xi1>
    %cst_67 = arith.constant 0.000000e+00 : f32
    %115 = vector.broadcast %cst_67 : f32 to vector<8x256xf32>
    %116 = vector.shape_cast %114 : vector<1x256xi1> to vector<1x256xi1>
    %117 = vector.broadcast %116 : vector<1x256xi1> to vector<8x256xi1>
    %118 = arith.select %117, %105, %115 : vector<8x256xi1>, vector<8x256xf32>
    %c6 = arith.constant 6 : index
    %c0_68 = arith.constant 0 : index
    %c0_69 = arith.constant 0 : index
    %119 = vector.load %arg2[%c6, %c0_68, %c0_69] : memref<9x8x8xf32, #tpu.memory_space<vmem>>, vector<1x8x8xf32>
    %120 = vector.shape_cast %119 : vector<1x8x8xf32> to vector<8x8xf32>
    %cst_70 = arith.constant dense<0.000000e+00> : vector<8x256xf32>
    %121 = tpu.matmul %120, %118, %cst_70 {dimension_numbers = #tpu.dot_dimension_numbers<[1], [0], [0], [1], [0, 0, 1, 1], [], []>} : vector<8x8xf32>, vector<8x256xf32>, vector<8x256xf32> -> vector<8x256xf32>
    %122 = arith.addf %103, %121 : vector<8x256xf32>
    %c0_71 = arith.constant 0 : index
    %c0_72 = arith.constant 0 : index
    %c0_73 = arith.constant 0 : index
    %c33 = arith.constant 33 : index
    %123 = vector.load %arg4[%c0_71, %c0_72, %c0_73, %c33] : memref<1x1x8x384xf32, #tpu.memory_space<vmem>>, vector<1x1x8x256xf32>
    %124 = vector.shape_cast %123 : vector<1x1x8x256xf32> to vector<8x256xf32>
    %c7 = arith.constant 7 : index
    %c0_74 = arith.constant 0 : index
    %c0_75 = arith.constant 0 : index
    %125 = vector.load %arg2[%c7, %c0_74, %c0_75] : memref<9x8x8xf32, #tpu.memory_space<vmem>>, vector<1x8x8xf32>
    %126 = vector.shape_cast %125 : vector<1x8x8xf32> to vector<8x8xf32>
    %cst_76 = arith.constant dense<0.000000e+00> : vector<8x256xf32>
    %127 = tpu.matmul %126, %124, %cst_76 {dimension_numbers = #tpu.dot_dimension_numbers<[1], [0], [0], [1], [0, 0, 1, 1], [], []>} : vector<8x8xf32>, vector<8x256xf32>, vector<8x256xf32> -> vector<8x256xf32>
    %128 = arith.addf %122, %127 : vector<8x256xf32>
    %c0_77 = arith.constant 0 : index
    %c0_78 = arith.constant 0 : index
    %c0_79 = arith.constant 0 : index
    %c34 = arith.constant 34 : index
    %129 = vector.load %arg4[%c0_77, %c0_78, %c0_79, %c34] : memref<1x1x8x384xf32, #tpu.memory_space<vmem>>, vector<1x1x8x256xf32>
    %130 = vector.shape_cast %129 : vector<1x1x8x256xf32> to vector<8x256xf32>
    %c1_i32_80 = arith.constant 1 : i32
    %131 = vector.broadcast %c1_i32_80 : i32 to vector<1x256xi32>
    %132 = arith.addi %16, %131 : vector<1x256xi32>
    %c0_i32_81 = arith.constant 0 : i32
    %133 = vector.broadcast %c0_i32_81 : i32 to vector<1x256xi32>
    %134 = arith.cmpi sge, %132, %133 : vector<1x256xi32>
    %c1_i32_82 = arith.constant 1 : i32
    %135 = vector.broadcast %c1_i32_82 : i32 to vector<1x256xi32>
    %136 = arith.addi %16, %135 : vector<1x256xi32>
    %c16_i32_83 = arith.constant 16 : i32
    %137 = vector.broadcast %c16_i32_83 : i32 to vector<1x256xi32>
    %138 = arith.cmpi slt, %136, %137 : vector<1x256xi32>
    %139 = arith.andi %134, %138 : vector<1x256xi1>
    %cst_84 = arith.constant 0.000000e+00 : f32
    %140 = vector.broadcast %cst_84 : f32 to vector<8x256xf32>
    %141 = vector.shape_cast %139 : vector<1x256xi1> to vector<1x256xi1>
    %142 = vector.broadcast %141 : vector<1x256xi1> to vector<8x256xi1>
    %143 = arith.select %142, %130, %140 : vector<8x256xi1>, vector<8x256xf32>
    %c8 = arith.constant 8 : index
    %c0_85 = arith.constant 0 : index
    %c0_86 = arith.constant 0 : index
    %144 = vector.load %arg2[%c8, %c0_85, %c0_86] : memref<9x8x8xf32, #tpu.memory_space<vmem>>, vector<1x8x8xf32>
    %145 = vector.shape_cast %144 : vector<1x8x8xf32> to vector<8x8xf32>
    %cst_87 = arith.constant dense<0.000000e+00> : vector<8x256xf32>
    %146 = tpu.matmul %145, %143, %cst_87 {dimension_numbers = #tpu.dot_dimension_numbers<[1], [0], [0], [1], [0, 0, 1, 1], [], []>} : vector<8x8xf32>, vector<8x256xf32>, vector<8x256xf32> -> vector<8x256xf32>
    %147 = arith.addf %128, %146 : vector<8x256xf32>
    %c0_88 = arith.constant 0 : index
    %c0_89 = arith.constant 0 : index
    %148 = vector.load %arg3[%c0_88, %c0_89] : memref<8x1xf32, #tpu.memory_space<vmem>>, vector<8x1xf32>
    %149 = vector.broadcast %148 : vector<8x1xf32> to vector<8x256xf32>
    %150 = arith.addf %147, %149 : vector<8x256xf32>
    %c0_90 = arith.constant 0 : index
    %c0_91 = arith.constant 0 : index
    %c0_92 = arith.constant 0 : index
    %151 = vector.load %arg5[%c0_90, %c0_91, %c0_92] : memref<1x8x256xf32, #tpu.memory_space<vmem>>, vector<1x8x256xf32>
    %152 = vector.shape_cast %151 : vector<1x8x256xf32> to vector<8x256xf32>
    %153 = vector.shape_cast %150 : vector<8x256xf32> to vector<1x8x256xf32>
    tpu.vector_store %arg5[%c0_90, %c0_91, %c0_92], %153 {strides = array<i32>} : memref<1x8x256xf32, #tpu.memory_space<vmem>>, vector<1x8x256xf32>,
    %cst_93 = arith.constant dense<0.000000e+00> : vector<8xf32>
    %154 = vector.multi_reduction <add>, %150, %cst_93 [1] : vector<8x256xf32> to vector<8xf32>
    %155 = vector.shape_cast %154 : vector<8xf32> to vector<8x1xf32>
    %c0_94 = arith.constant 0 : index
    %c0_95 = arith.constant 0 : index
    %c0_96 = arith.constant 0 : index
    %c0_97 = arith.constant 0 : index
    %156 = vector.load %arg6[%c0_94, %c0_95, %c0_96, %c0_97] : memref<1x1x8x2xf32, #tpu.memory_space<vmem>>, vector<1x1x8x1xf32>
    %157 = vector.shape_cast %156 : vector<1x1x8x1xf32> to vector<8x1xf32>
    %158 = vector.shape_cast %155 : vector<8x1xf32> to vector<1x1x8x1xf32>
    tpu.vector_store %arg6[%c0_94, %c0_95, %c0_96, %c0_97], %158 {strides = array<i32>} : memref<1x1x8x2xf32, #tpu.memory_space<vmem>>, vector<1x1x8x1xf32>,
    %159 = arith.mulf %150, %150 : vector<8x256xf32>
    %cst_98 = arith.constant dense<0.000000e+00> : vector<8xf32>
    %160 = vector.multi_reduction <add>, %159, %cst_98 [1] : vector<8x256xf32> to vector<8xf32>
    %161 = vector.shape_cast %160 : vector<8xf32> to vector<8x1xf32>
    %c0_99 = arith.constant 0 : index
    %c0_100 = arith.constant 0 : index
    %c0_101 = arith.constant 0 : index
    %c1_102 = arith.constant 1 : index
    %162 = vector.load %arg6[%c0_99, %c0_100, %c0_101, %c1_102] : memref<1x1x8x2xf32, #tpu.memory_space<vmem>>, vector<1x1x8x1xf32>
    %163 = vector.shape_cast %162 : vector<1x1x8x1xf32> to vector<8x1xf32>
    %164 = vector.shape_cast %161 : vector<8x1xf32> to vector<1x1x8x1xf32>
    tpu.vector_store %arg6[%c0_99, %c0_100, %c0_101, %c1_102], %164 {strides = array<i32>} : memref<1x1x8x2xf32, #tpu.memory_space<vmem>>, vector<1x1x8x1xf32>,
    return
  }
  func.func @transform_0(%arg0: i32, %arg1: i32) -> (i32, i32, i32) {
    %c0_i32 = arith.constant 0 : i32
    %c0_i32_0 = arith.constant 0 : i32
    %c0_i32_1 = arith.constant 0 : i32
    %c0_i32_2 = arith.constant 0 : i32
    return %c0_i32, %c0_i32_0, %c0_i32_1 : i32, i32, i32
  }
  func.func @transform_1(%arg0: i32, %arg1: i32) -> (i32, i32) {
    %c0_i32 = arith.constant 0 : i32
    %c0_i32_0 = arith.constant 0 : i32
    %c0_i32_1 = arith.constant 0 : i32
    return %c0_i32, %c0_i32_0 : i32, i32
  }
  func.func @transform_2(%arg0: i32, %arg1: i32) -> (i32, i32, i32, i32) {
    %c0_i32 = arith.constant 0 : i32
    %c0_i32_0 = arith.constant 0 : i32
    %c0_i32_1 = arith.constant 0 : i32
    return %arg0, %arg1, %c0_i32, %c0_i32_0 : i32, i32, i32, i32
  }
  func.func @transform_3(%arg0: i32, %arg1: i32) -> (i32, i32, i32) {
    %c0_i32 = arith.constant 0 : i32
    %c0_i32_0 = arith.constant 0 : i32
    return %arg0, %c0_i32, %arg1 : i32, i32, i32
  }
  func.func @transform_4(%arg0: i32, %arg1: i32) -> (i32, i32, i32, i32) {
    %c0_i32 = arith.constant 0 : i32
    %c0_i32_0 = arith.constant 0 : i32
    %c0_i32_1 = arith.constant 0 : i32
    return %arg0, %arg1, %c0_i32, %c0_i32_0 : i32, i32, i32, i32
  }
}

module attributes {stable_mosaic.version = 11 : i64} {
  func.func @kernel(%arg0: i32, %arg1: i32, %arg2: memref<1x8x256xf32, #tpu.memory_space<vmem>>, %arg3: memref<8x1xf32, #tpu.memory_space<vmem>>, %arg4: memref<8x1xf32, #tpu.memory_space<vmem>>, %arg5: memref<8x8xf32, #tpu.memory_space<vmem>>, %arg6: memref<1x8x256xf32, #tpu.memory_space<vmem>>, %arg7: memref<8x8xf32, #tpu.memory_space<vmem>>, %arg8: memref<1x8x256xf32, #tpu.memory_space<vmem>>, %arg9: memref<1x1x8x2xf32, #tpu.memory_space<vmem>>) attributes {dimension_semantics = [#tpu.dimension_semantics<parallel>, #tpu.dimension_semantics<parallel>], iteration_bounds = array<i64: 2, 1>, scalar_prefetch = 0 : i64, scratch_operands = 0 : i64, tpu.core_type = #tpu.core_type<tc>, window_params = [{transform_indices = @transform_0, window_bounds = array<i64: 1, 8, 256>}, {pipeline_mode = #tpu.pipeline_mode<synchronous>, transform_indices = @transform_1, window_bounds = array<i64: 8, 1>}, {pipeline_mode = #tpu.pipeline_mode<synchronous>, transform_indices = @transform_2, window_bounds = array<i64: 8, 1>}, {pipeline_mode = #tpu.pipeline_mode<synchronous>, transform_indices = @transform_3, window_bounds = array<i64: 8, 8>}, {transform_indices = @transform_4, window_bounds = array<i64: 1, 8, 256>}, {pipeline_mode = #tpu.pipeline_mode<synchronous>, transform_indices = @transform_5, window_bounds = array<i64: 8, 8>}, {transform_indices = @transform_6, window_bounds = array<i64: 1, 8, 256>}, {transform_indices = @transform_7, window_bounds = array<i64: 1, 1, 8, 2>}]} {
    %c0 = arith.constant 0 : index
    %c0_0 = arith.constant 0 : index
    %0 = vector.load %arg3[%c0, %c0_0] : memref<8x1xf32, #tpu.memory_space<vmem>>, vector<8x1xf32>
    %c0_1 = arith.constant 0 : index
    %c0_2 = arith.constant 0 : index
    %c0_3 = arith.constant 0 : index
    %1 = vector.load %arg2[%c0_1, %c0_2, %c0_3] : memref<1x8x256xf32, #tpu.memory_space<vmem>>, vector<1x8x256xf32>
    %2 = vector.shape_cast %1 : vector<1x8x256xf32> to vector<8x256xf32>
    %3 = vector.broadcast %0 : vector<8x1xf32> to vector<8x256xf32>
    %4 = arith.mulf %3, %2 : vector<8x256xf32>
    %c0_4 = arith.constant 0 : index
    %c0_5 = arith.constant 0 : index
    %5 = vector.load %arg4[%c0_4, %c0_5] : memref<8x1xf32, #tpu.memory_space<vmem>>, vector<8x1xf32>
    %6 = vector.broadcast %5 : vector<8x1xf32> to vector<8x256xf32>
    %7 = arith.addf %4, %6 : vector<8x256xf32>
    %cst = arith.constant 0.000000e+00 : f32
    %8 = vector.broadcast %cst : f32 to vector<8x256xf32>
    %9 = arith.maximumf %7, %8 : vector<8x256xf32>
    %c0_6 = arith.constant 0 : index
    %c0_7 = arith.constant 0 : index
    %10 = vector.load %arg5[%c0_6, %c0_7] : memref<8x8xf32, #tpu.memory_space<vmem>>, vector<8x8xf32>
    %cst_8 = arith.constant dense<0.000000e+00> : vector<8x256xf32>
    %11 = tpu.matmul %10, %9, %cst_8 {dimension_numbers = #tpu.dot_dimension_numbers<[1], [0], [0], [1], [0, 0, 1, 1], [], []>} : vector<8x8xf32>, vector<8x256xf32>, vector<8x256xf32> -> vector<8x256xf32>
    %c0_9 = arith.constant 0 : index
    %c0_10 = arith.constant 0 : index
    %12 = vector.load %arg7[%c0_9, %c0_10] : memref<8x8xf32, #tpu.memory_space<vmem>>, vector<8x8xf32>
    %c0_11 = arith.constant 0 : index
    %c0_12 = arith.constant 0 : index
    %c0_13 = arith.constant 0 : index
    %13 = vector.load %arg6[%c0_11, %c0_12, %c0_13] : memref<1x8x256xf32, #tpu.memory_space<vmem>>, vector<1x8x256xf32>
    %14 = vector.shape_cast %13 : vector<1x8x256xf32> to vector<8x256xf32>
    %cst_14 = arith.constant dense<0.000000e+00> : vector<8x256xf32>
    %15 = tpu.matmul %12, %14, %cst_14 {dimension_numbers = #tpu.dot_dimension_numbers<[1], [0], [0], [1], [0, 0, 1, 1], [], []>} : vector<8x8xf32>, vector<8x256xf32>, vector<8x256xf32> -> vector<8x256xf32>
    %16 = arith.addf %11, %15 : vector<8x256xf32>
    %cst_15 = arith.constant 0.000000e+00 : f32
    %17 = vector.broadcast %cst_15 : f32 to vector<8x256xf32>
    %18 = arith.maximumf %16, %17 : vector<8x256xf32>
    %c0_16 = arith.constant 0 : index
    %c0_17 = arith.constant 0 : index
    %c0_18 = arith.constant 0 : index
    %19 = vector.load %arg8[%c0_16, %c0_17, %c0_18] : memref<1x8x256xf32, #tpu.memory_space<vmem>>, vector<1x8x256xf32>
    %20 = vector.shape_cast %19 : vector<1x8x256xf32> to vector<8x256xf32>
    %21 = vector.shape_cast %18 : vector<8x256xf32> to vector<1x8x256xf32>
    tpu.vector_store %arg8[%c0_16, %c0_17, %c0_18], %21 {strides = array<i32>} : memref<1x8x256xf32, #tpu.memory_space<vmem>>, vector<1x8x256xf32>,
    %cst_19 = arith.constant dense<0.000000e+00> : vector<8xf32>
    %22 = vector.multi_reduction <add>, %18, %cst_19 [1] : vector<8x256xf32> to vector<8xf32>
    %23 = vector.shape_cast %22 : vector<8xf32> to vector<8x1xf32>
    %c0_20 = arith.constant 0 : index
    %c0_21 = arith.constant 0 : index
    %c0_22 = arith.constant 0 : index
    %c0_23 = arith.constant 0 : index
    %24 = vector.load %arg9[%c0_20, %c0_21, %c0_22, %c0_23] : memref<1x1x8x2xf32, #tpu.memory_space<vmem>>, vector<1x1x8x1xf32>
    %25 = vector.shape_cast %24 : vector<1x1x8x1xf32> to vector<8x1xf32>
    %26 = vector.shape_cast %23 : vector<8x1xf32> to vector<1x1x8x1xf32>
    tpu.vector_store %arg9[%c0_20, %c0_21, %c0_22, %c0_23], %26 {strides = array<i32>} : memref<1x1x8x2xf32, #tpu.memory_space<vmem>>, vector<1x1x8x1xf32>,
    %27 = arith.mulf %18, %18 : vector<8x256xf32>
    %cst_24 = arith.constant dense<0.000000e+00> : vector<8xf32>
    %28 = vector.multi_reduction <add>, %27, %cst_24 [1] : vector<8x256xf32> to vector<8xf32>
    %29 = vector.shape_cast %28 : vector<8xf32> to vector<8x1xf32>
    %c0_25 = arith.constant 0 : index
    %c0_26 = arith.constant 0 : index
    %c0_27 = arith.constant 0 : index
    %c1 = arith.constant 1 : index
    %30 = vector.load %arg9[%c0_25, %c0_26, %c0_27, %c1] : memref<1x1x8x2xf32, #tpu.memory_space<vmem>>, vector<1x1x8x1xf32>
    %31 = vector.shape_cast %30 : vector<1x1x8x1xf32> to vector<8x1xf32>
    %32 = vector.shape_cast %29 : vector<8x1xf32> to vector<1x1x8x1xf32>
    tpu.vector_store %arg9[%c0_25, %c0_26, %c0_27, %c1], %32 {strides = array<i32>} : memref<1x1x8x2xf32, #tpu.memory_space<vmem>>, vector<1x1x8x1xf32>,
    return
  }
  func.func @transform_0(%arg0: i32, %arg1: i32) -> (i32, i32, i32) {
    %c0_i32 = arith.constant 0 : i32
    %c0_i32_0 = arith.constant 0 : i32
    return %arg0, %c0_i32, %arg1 : i32, i32, i32
  }
  func.func @transform_1(%arg0: i32, %arg1: i32) -> (i32, i32) {
    %c0_i32 = arith.constant 0 : i32
    %c0_i32_0 = arith.constant 0 : i32
    %c0_i32_1 = arith.constant 0 : i32
    return %c0_i32, %c0_i32_0 : i32, i32
  }
  func.func @transform_2(%arg0: i32, %arg1: i32) -> (i32, i32) {
    %c0_i32 = arith.constant 0 : i32
    %c0_i32_0 = arith.constant 0 : i32
    %c0_i32_1 = arith.constant 0 : i32
    return %c0_i32, %c0_i32_0 : i32, i32
  }
  func.func @transform_3(%arg0: i32, %arg1: i32) -> (i32, i32) {
    %c0_i32 = arith.constant 0 : i32
    %c0_i32_0 = arith.constant 0 : i32
    %c0_i32_1 = arith.constant 0 : i32
    return %c0_i32, %c0_i32_0 : i32, i32
  }
  func.func @transform_4(%arg0: i32, %arg1: i32) -> (i32, i32, i32) {
    %c0_i32 = arith.constant 0 : i32
    %c0_i32_0 = arith.constant 0 : i32
    return %arg0, %c0_i32, %arg1 : i32, i32, i32
  }
  func.func @transform_5(%arg0: i32, %arg1: i32) -> (i32, i32) {
    %c0_i32 = arith.constant 0 : i32
    %c0_i32_0 = arith.constant 0 : i32
    %c0_i32_1 = arith.constant 0 : i32
    return %c0_i32, %c0_i32_0 : i32, i32
  }
  func.func @transform_6(%arg0: i32, %arg1: i32) -> (i32, i32, i32) {
    %c0_i32 = arith.constant 0 : i32
    %c0_i32_0 = arith.constant 0 : i32
    return %arg0, %c0_i32, %arg1 : i32, i32, i32
  }
  func.func @transform_7(%arg0: i32, %arg1: i32) -> (i32, i32, i32, i32) {
    %c0_i32 = arith.constant 0 : i32
    %c0_i32_0 = arith.constant 0 : i32
    %c0_i32_1 = arith.constant 0 : i32
    return %arg0, %arg1, %c0_i32, %c0_i32_0 : i32, i32, i32, i32
  }
}

module attributes {stable_mosaic.version = 11 : i64} {
  func.func @_bn_affine_kernel(%arg0: i32, %arg1: i32, %arg2: memref<1x8x256xf32, #tpu.memory_space<vmem>>, %arg3: memref<8x1xf32, #tpu.memory_space<vmem>>, %arg4: memref<8x1xf32, #tpu.memory_space<vmem>>, %arg5: memref<1x8x256xf32, #tpu.memory_space<vmem>>) attributes {dimension_semantics = [#tpu.dimension_semantics<parallel>, #tpu.dimension_semantics<parallel>], iteration_bounds = array<i64: 2, 1>, scalar_prefetch = 0 : i64, scratch_operands = 0 : i64, tpu.core_type = #tpu.core_type<tc>, window_params = [{transform_indices = @transform_0, window_bounds = array<i64: 1, 8, 256>}, {pipeline_mode = #tpu.pipeline_mode<synchronous>, transform_indices = @transform_1, window_bounds = array<i64: 8, 1>}, {pipeline_mode = #tpu.pipeline_mode<synchronous>, transform_indices = @transform_2, window_bounds = array<i64: 8, 1>}, {transform_indices = @transform_3, window_bounds = array<i64: 1, 8, 256>}]} {
    %c0 = arith.constant 0 : index
    %c0_0 = arith.constant 0 : index
    %0 = vector.load %arg3[%c0, %c0_0] : memref<8x1xf32, #tpu.memory_space<vmem>>, vector<8x1xf32>
    %c0_1 = arith.constant 0 : index
    %c0_2 = arith.constant 0 : index
    %c0_3 = arith.constant 0 : index
    %1 = vector.load %arg2[%c0_1, %c0_2, %c0_3] : memref<1x8x256xf32, #tpu.memory_space<vmem>>, vector<1x8x256xf32>
    %2 = vector.shape_cast %1 : vector<1x8x256xf32> to vector<8x256xf32>
    %3 = vector.broadcast %0 : vector<8x1xf32> to vector<8x256xf32>
    %4 = arith.mulf %3, %2 : vector<8x256xf32>
    %c0_4 = arith.constant 0 : index
    %c0_5 = arith.constant 0 : index
    %5 = vector.load %arg4[%c0_4, %c0_5] : memref<8x1xf32, #tpu.memory_space<vmem>>, vector<8x1xf32>
    %6 = vector.broadcast %5 : vector<8x1xf32> to vector<8x256xf32>
    %7 = arith.addf %4, %6 : vector<8x256xf32>
    %c0_6 = arith.constant 0 : index
    %c0_7 = arith.constant 0 : index
    %c0_8 = arith.constant 0 : index
    %8 = vector.load %arg5[%c0_6, %c0_7, %c0_8] : memref<1x8x256xf32, #tpu.memory_space<vmem>>, vector<1x8x256xf32>
    %9 = vector.shape_cast %8 : vector<1x8x256xf32> to vector<8x256xf32>
    %10 = vector.shape_cast %7 : vector<8x256xf32> to vector<1x8x256xf32>
    tpu.vector_store %arg5[%c0_6, %c0_7, %c0_8], %10 {strides = array<i32>} : memref<1x8x256xf32, #tpu.memory_space<vmem>>, vector<1x8x256xf32>,
    return
  }
  func.func @transform_0(%arg0: i32, %arg1: i32) -> (i32, i32, i32) {
    %c0_i32 = arith.constant 0 : i32
    %c0_i32_0 = arith.constant 0 : i32
    return %arg0, %c0_i32, %arg1 : i32, i32, i32
  }
  func.func @transform_1(%arg0: i32, %arg1: i32) -> (i32, i32) {
    %c0_i32 = arith.constant 0 : i32
    %c0_i32_0 = arith.constant 0 : i32
    %c0_i32_1 = arith.constant 0 : i32
    return %c0_i32, %c0_i32_0 : i32, i32
  }
  func.func @transform_2(%arg0: i32, %arg1: i32) -> (i32, i32) {
    %c0_i32 = arith.constant 0 : i32
    %c0_i32_0 = arith.constant 0 : i32
    %c0_i32_1 = arith.constant 0 : i32
    return %c0_i32, %c0_i32_0 : i32, i32
  }
  func.func @transform_3(%arg0: i32, %arg1: i32) -> (i32, i32, i32) {
    %c0_i32 = arith.constant 0 : i32
    %c0_i32_0 = arith.constant 0 : i32
    return %arg0, %c0_i32, %arg1 : i32, i32, i32
  }
}

</mosaic_0001>

<llo_original>
// kernel: gfixed_layer2_forward.5
$region0: #{gfixed_layer2_forward.5}
  #allocation0 [shape = 'u32[]', space=smem, size = 0x4, offset = 0x4, fixed_abs, tag = 'smem constant byte address 0x4 - core index']
  #allocation1 [shape = 'u32[144,128]{1,0:T(1,128)}', space=vmem, size = 0x12000, scoped, tag = 'internal scratch']
  %s0 = inlined_call_operand.vmem [shape: f32[2,8,256], index: 0, kind: input, shape index: {}]
  %s1 = inlined_call_operand.vmem [shape: f32[8,1], index: 1, kind: input, shape index: {}]
  %s2 = inlined_call_operand.vmem [shape: f32[8,1], index: 2, kind: input, shape index: {}]
  %s3 = inlined_call_operand.vmem [shape: f32[2,8,256], index: 3, kind: output, shape index: {}]
  %s4 = sld [smem:[#allocation0]]
  $region45: #{gfixed_layer2_forward.5} parent=0
    _
  %s6 = ssub.s32 1, %s4
  %s7 = scalar_select 0, %s6, %s4
  loop: start=0, step=1, limit=4
  $region2: #{gfixed_layer2_forward.5} parent=0 // loop_pre_header
    _
  $region3: #{gfixed_layer2_forward.5} parent=0 // loop_header
    %s9 = sphi 0, %s13
    %p10 = scmp.ge.s32.totalorder %s9, 4
    %s16 = sphi 0, %s28
    %s17 = sphi 0, %s24
    %s18 = sphi 0, %s16
    %s19 = sphi 0, %s17
    %s20 = sphi 0, %s18
    %s21 = sphi 0, %s19
    %s33 = sphi 0, %s35
    %s36 = sphi 0, %s33
    %s37 = sphi 0, %s36
    %s53 = sphi 0, %s37
    %s57 = sphi 0, %s57
    %s59 = sphi 0, %s57
    %s60 = sphi 0, %s59
    %s74 = sphi 0, %s60
    %s78 = sphi 0, %s78
    %s80 = sphi 0, %s78
    %s81 = sphi 0, %s80
    %s95 = sphi 0, %s81
    %s103 = sphi 0, %s105
    %s106 = sphi 0, %s103
    %s107 = sphi 0, %s106
    %s123 = sphi 0, %s107
  $region4: #{gfixed_layer2_forward.5} parent=0 // loop_header_branch
    %12 = sbr.rel (%p10) target = $region8
  $region5: #{gfixed_layer2_forward.5} parent=0 // loop_body
    %s14 = ssub.s32 %s9, 1
    %s15 = ssub.s32 %s9, 2
    %s22 = sadd.s32 1, %s17
    %p23 = scmp.ge.s32.totalorder %s22, 1
    %s24 = scalar_select %p23, 0, %s22
    %s25 = sadd.s32 1, %s16
    %s26 = scalar_select %p23, %s25, %s16
    %p27 = scmp.ge.s32.totalorder %s26, 2
    %s28 = scalar_select %p27, 0, %s26
    %s29 = ssub.s32 %s16, %s28
    %s30 = ssub.s32 %s17, %s24
    %s31 = sor.u32 %s29, %s30
    %p32 = scmp.eq.s32.totalorder %s31, 0
    %s34 = sadd.s32 %s33, 1
    %s35 = scalar_select %p32, %s33, %s34
    %p38 = pneg %p32
    %p39 = scmp.eq.s32.totalorder %s9, 1
    %p40 = por %p38, %p39
    %p41 = scmp.ne.s32.totalorder %s33, %s36
    %p42 = scmp.eq.s32.totalorder %s9, 0
    %p43 = por %p41, %p42
    %p44 = scmp.ne.s32.totalorder %s33, %s36
    %p45 = scmp.eq.s32.totalorder %s14, 1
    %p46 = por %p44, %p45
    %p47 = scmp.ne.s32.totalorder %s36, %s37
    %p48 = scmp.eq.s32.totalorder %s14, 0
    %p49 = por %p47, %p48
    %p50 = scmp.ne.s32.totalorder %s36, %s37
    %p51 = scmp.eq.s32.totalorder %s15, 1
    %p52 = por %p50, %p51
    %p54 = scmp.ne.s32.totalorder %s37, %s53
    %p55 = scmp.eq.s32.totalorder %s15, 0
    %p56 = por %p54, %p55
    %s58 = sadd.s32 %s57, 1
    %p61 = scmp.eq.s32.totalorder %s9, 1
    %p62 = scmp.ne.s32.totalorder %s57, %s59
    %p63 = scmp.eq.s32.totalorder %s9, 0
    %p64 = por %p62, %p63
    %p65 = scmp.ne.s32.totalorder %s57, %s59
    %p66 = scmp.eq.s32.totalorder %s14, 1
    %p67 = por %p65, %p66
    %p68 = scmp.ne.s32.totalorder %s59, %s60
    %p69 = scmp.eq.s32.totalorder %s14, 0
    %p70 = por %p68, %p69
    %p71 = scmp.ne.s32.totalorder %s59, %s60
    %p72 = scmp.eq.s32.totalorder %s15, 1
    %p73 = por %p71, %p72
    %p75 = scmp.ne.s32.totalorder %s60, %s74
    %p76 = scmp.eq.s32.totalorder %s15, 0
    %p77 = por %p75, %p76
    %s79 = sadd.s32 %s78, 1
    %p82 = scmp.eq.s32.totalorder %s9, 1
    %p83 = scmp.ne.s32.totalorder %s78, %s80
    %p84 = scmp.eq.s32.totalorder %s9, 0
    %p85 = por %p83, %p84
    %p86 = scmp.ne.s32.totalorder %s78, %s80
    %p87 = scmp.eq.s32.totalorder %s14, 1
    %p88 = por %p86, %p87
    %p89 = scmp.ne.s32.totalorder %s80, %s81
    %p90 = scmp.eq.s32.totalorder %s14, 0
    %p91 = por %p89, %p90
    %p92 = scmp.ne.s32.totalorder %s80, %s81
    %p93 = scmp.eq.s32.totalorder %s15, 1
    %p94 = por %p92, %p93
    %p96 = scmp.ne.s32.totalorder %s81, %s95
    %p97 = scmp.eq.s32.totalorder %s15, 0
    %p98 = por %p96, %p97
    %s99 = ssub.s32 %s16, %s28
    %s100 = ssub.s32 %s17, %s24
    %s101 = sor.u32 %s99, %s100
    %p102 = scmp.eq.s32.totalorder %s101, 0
    %s104 = sadd.s32 %s103, 1
    %s105 = scalar_select %p102, %s103, %s104
    %p108 = pneg %p102
    %p109 = scmp.eq.s32.totalorder %s9, 1
    %p110 = por %p108, %p109
    %p111 = scmp.ne.s32.totalorder %s103, %s106
    %p112 = scmp.eq.s32.totalorder %s9, 0
    %p113 = por %p111, %p112
    %p114 = scmp.ne.s32.totalorder %s103, %s106
    %p115 = scmp.eq.s32.totalorder %s14, 1
    %p116 = por %p114, %p115
    %p117 = scmp.ne.s32.totalorder %s106, %s107
    %p118 = scmp.eq.s32.totalorder %s14, 0
    %p119 = por %p117, %p118
    %p120 = scmp.ne.s32.totalorder %s106, %s107
    %p121 = scmp.eq.s32.totalorder %s15, 1
    %p122 = por %p120, %p121
    %p124 = scmp.ne.s32.totalorder %s107, %s123
    %p125 = scmp.eq.s32.totalorder %s15, 0
    %p126 = por %p124, %p125
    %p127 = scmp.le.s32.totalorder 1, %s9
    %p128 = scmp.lt.s32.totalorder %s9, 3
    %p129 = pnand %p127, %p128
    %p130 = pneg %p129
    // Predicated region
    $region9: #{gfixed_layer2_forward.5} parent=5 // pred_check
      _
    $region10: #{gfixed_layer2_forward.5} parent=5 // pred_check_branch
      %132 = sbr.rel (%p129) target = $region12
    $region11: #{gfixed_layer2_forward.5} parent=5 // pred_region
      %s133 = ssub.s32 %s9, 1
      // Predicated region
      $region13: #{gfixed_layer2_forward.5} parent=11 // pred_check
        %p134 = pneg %p70
      $region14: #{gfixed_layer2_forward.5} parent=11 // pred_check_branch
        %136 = sbr.rel (%p134) target = $region16
      $region15: #{gfixed_layer2_forward.5} parent=11 // pred_region
        _
      $region16: #{gfixed_layer2_forward.5} parent=11 // pred_fallthru
        _
      // Predicated region
      $region17: #{gfixed_layer2_forward.5} parent=11 // pred_check
        %p137 = pneg %p91
      $region18: #{gfixed_layer2_forward.5} parent=11 // pred_check_branch
        %139 = sbr.rel (%p137) target = $region20
      $region19: #{gfixed_layer2_forward.5} parent=11 // pred_region
        _
      $region20: #{gfixed_layer2_forward.5} parent=11 // pred_fallthru
        _
    $region12: #{gfixed_layer2_forward.5} parent=5 // pred_fallthru
      _
    %p140 = scmp.lt.s32.totalorder %s9, 2
    // Predicated region
    $region21: #{gfixed_layer2_forward.5} parent=5 // pred_check
      %p141 = pneg %p140
    $region22: #{gfixed_layer2_forward.5} parent=5 // pred_check_branch
      %143 = sbr.rel (%p141) target = $region24
    $region23: #{gfixed_layer2_forward.5} parent=5 // pred_region
      // Predicated region
      $region25: #{gfixed_layer2_forward.5} parent=23 // pred_check
        %p144 = pneg %p43
      $region26: #{gfixed_layer2_forward.5} parent=23 // pred_check_branch
        %146 = sbr.rel (%p144) target = $region28
      $region27: #{gfixed_layer2_forward.5} parent=23 // pred_region
        %s147 = smul.u32 2, %s17
        %p148 = scmp.lt.s32.totalorder %s16, 1
        %s149 = scalar_select %p148, %s16, 1
        %p150 = scmp.lt.s32.totalorder %s147, 1
        %s151 = scalar_select %p150, %s147, 1
        %s152 = smul.addr %s149, 2
        %s153 = sadd.s32 %s151, %s152
        %s154 = smul.addr %s153, 8
        %s155 = scalar_lea.vmem %s0, %s154
        %s156 = smul.u32 2, %s17
      $region28: #{gfixed_layer2_forward.5} parent=23 // pred_fallthru
        _
    $region24: #{gfixed_layer2_forward.5} parent=5 // pred_fallthru
      _
    %p157 = scmp.le.s32.totalorder 1, %s9
    %p158 = scmp.lt.s32.totalorder %s9, 3
    %p159 = pnand %p157, %p158
    %p160 = pneg %p159
    // Predicated region
    $region29: #{gfixed_layer2_forward.5} parent=5 // pred_check
      _
    $region30: #{gfixed_layer2_forward.5} parent=5 // pred_check_branch
      %162 = sbr.rel (%p159) target = $region32
    $region31: #{gfixed_layer2_forward.5} parent=5 // pred_region
      %s163 = ssub.s32 %s9, 1
      %s164 = smul.u32 2, %s19
      %p165 = scmp.lt.s32.totalorder %s18, 1
      %s166 = scalar_select %p165, %s18, 1
      %p167 = scmp.lt.s32.totalorder %s164, 1
      %s168 = scalar_select %p167, %s164, 1
      %s169 = smul.addr %s166, 2
      %s170 = sadd.s32 %s168, %s169
      %s171 = smul.addr %s170, 8
      %s172 = scalar_lea.vmem %s0, %s171
      %p173 = pneg %p49
      %p174 = pneg %p46
      %p175 = pneg %p70
      %p176 = pneg %p67
      %p177 = pneg %p91
      %p178 = pneg %p88
      %p179 = pneg %p119
      %p180 = pneg %p116
      %s181 = smul.u32 2, %s19
      %p182 = scmp.lt.s32.totalorder %s18, 1
      %s183 = scalar_select %p182, %s18, 1
      %p184 = scmp.lt.s32.totalorder %s181, 1
      %s185 = scalar_select %p184, %s181, 1
      %s186 = smul.addr %s183, 2
      %s187 = sadd.s32 %s185, %s186
      %s188 = smul.addr %s187, 8
      %s189 = scalar_lea.vmem %s3, %s188
      %s190 = smul.u32 2, %s19
      %p191 = scmp.lt.s32.totalorder %s18, 1
      %s192 = scalar_select %p191, %s18, 1
      %p193 = scmp.lt.s32.totalorder %s190, 1
      %s194 = scalar_select %p193, %s190, 1
      %s195 = smul.addr %s192, 2
      %s196 = sadd.s32 %s194, %s195
      %s197 = smul.addr %s196, 8
      %s198 = scalar_lea.vmem %s0, %s197
      %s199 = smul.u32 2, %s19
      %s200 = smul.u32 2, %s19
      %p201 = scmp.lt.s32.totalorder %s18, 1
      %s202 = scalar_select %p201, %s18, 1
      %p203 = scmp.lt.s32.totalorder %s200, 1
      %s204 = scalar_select %p203, %s200, 1
      %s205 = smul.addr %s202, 2
      %s206 = sadd.s32 %s204, %s205
      %s207 = smul.addr %s206, 8
      %s208 = scalar_lea.vmem %s3, %s207
      %s209 = smul.u32 2, %s19
      %v210 = vld [vmem:[%s1] sm:$0xff]
      %v211 = vld [vmem:[%s198] sm:$0xff]
      %v212 = vld [vmem:[%s198 + $0x8] sm:$0xff]
      %214 = vset.pattern.permute.xlu0 0
      %215 = vperm.xlu0 %214, %v210
      %v216 = vpop.permute.xlu0 %215
      %v218 = vmul.f32 %v216, %v211
      %v219 = vmul.f32 %v216, %v212
      %v220 = vld [vmem:[%s2] sm:$0xff]
      %222 = vset.pattern.permute.xlu0 0
      %223 = vperm.xlu0 %222, %v220
      %v224 = vpop.permute.xlu0 %223
      %v226 = vadd.f32 %v218, %v224
      %v227 = vadd.f32 %v219, %v224
      %228 = vst [vmem:[%s208] sm:$0xff] %v226
      %229 = vst [vmem:[%s208 + $0x8] sm:$0xff] %v227
      %s230 = smul.u32 2, %s19
      %p231 = scmp.lt.s32.totalorder %s18, 1
      %s232 = scalar_select %p231, %s18, 1
      %p233 = scmp.lt.s32.totalorder %s230, 1
      %s234 = scalar_select %p233, %s230, 1
      %s235 = smul.addr %s232, 2
      %s236 = sadd.s32 %s234, %s235
      %s237 = smul.addr %s236, 8
      %s238 = scalar_lea.vmem %s3, %s237
      // Predicated region
      $region33: #{gfixed_layer2_forward.5} parent=31 // pred_check
        %p239 = pneg %p116
      $region34: #{gfixed_layer2_forward.5} parent=31 // pred_check_branch
        %241 = sbr.rel (%p239) target = $region36
      $region35: #{gfixed_layer2_forward.5} parent=31 // pred_region
        %s242 = smul.u32 2, %s19
      $region36: #{gfixed_layer2_forward.5} parent=31 // pred_fallthru
        _
    $region32: #{gfixed_layer2_forward.5} parent=5 // pred_fallthru
      _
    %p243 = scmp.le.s32.totalorder 2, %s9
    // Predicated region
    $region37: #{gfixed_layer2_forward.5} parent=5 // pred_check
      %p244 = pneg %p243
    $region38: #{gfixed_layer2_forward.5} parent=5 // pred_check_branch
      %246 = sbr.rel (%p244) target = $region40
    $region39: #{gfixed_layer2_forward.5} parent=5 // pred_region
      %s247 = ssub.s32 %s9, 2
      // Predicated region
      $region41: #{gfixed_layer2_forward.5} parent=39 // pred_check
        %p248 = pneg %p122
      $region42: #{gfixed_layer2_forward.5} parent=39 // pred_check_branch
        %250 = sbr.rel (%p248) target = $region44
      $region43: #{gfixed_layer2_forward.5} parent=39 // pred_region
        %s251 = smul.u32 2, %s21
        %p252 = scmp.lt.s32.totalorder %s20, 1
        %s253 = scalar_select %p252, %s20, 1
        %p254 = scmp.lt.s32.totalorder %s251, 1
        %s255 = scalar_select %p254, %s251, 1
        %s256 = smul.addr %s253, 2
        %s257 = sadd.s32 %s255, %s256
        %s258 = smul.addr %s257, 8
        %s259 = scalar_lea.vmem %s3, %s258
      $region44: #{gfixed_layer2_forward.5} parent=39 // pred_fallthru
        _
    $region40: #{gfixed_layer2_forward.5} parent=5 // pred_fallthru
      _
  $region6: #{gfixed_layer2_forward.5} parent=0 // loop_footer
    %s13 = sadd.s32 1, %s9
  $region7: #{gfixed_layer2_forward.5} parent=0 // loop_footer_branch
    %8 = sbr.rel target = $region3
  $region8: #{gfixed_layer2_forward.5} parent=0 // loop_exit
    _

// kernel: gfixed_layer2_forward.4
$region0: #{gfixed_layer2_forward.4}
  #allocation0 [shape = 'u32[]', space=smem, size = 0x4, offset = 0x4, fixed_abs, tag = 'smem constant byte address 0x4 - core index']
  #allocation1 [shape = 'u32[144,128]{1,0:T(1,128)}', space=vmem, size = 0x12000, scoped, tag = 'internal scratch']
  %s0 = inlined_call_operand.vmem [shape: f32[2,8,256], index: 0, kind: input, shape index: {}]
  %s1 = inlined_call_operand.vmem [shape: f32[8,1], index: 1, kind: input, shape index: {}]
  %s2 = inlined_call_operand.vmem [shape: f32[8,1], index: 2, kind: input, shape index: {}]
  %s3 = inlined_call_operand.vmem [shape: f32[8,8], index: 3, kind: input, shape index: {}]
  %s4 = inlined_call_operand.vmem [shape: f32[2,8,256], index: 4, kind: input, shape index: {}]
  %s5 = inlined_call_operand.vmem [shape: f32[8,8], index: 5, kind: input, shape index: {}]
  %s6 = inlined_call_operand.vmem [shape: f32[2,8,256], index: 6, kind: output, shape index: {0}]
  %s7 = inlined_call_operand.vmem [shape: f32[2,1,8,2], index: 7, kind: output, shape index: {1}]
  %8 = xla_tuple %s6, %s7
  %s9 = sld [smem:[#allocation0]]
  $region65: #{gfixed_layer2_forward.4} parent=0
    _
  %s11 = ssub.s32 1, %s9
  %s12 = scalar_select 0, %s11, %s9
  loop: start=0, step=1, limit=4
  $region2: #{gfixed_layer2_forward.4} parent=0 // loop_pre_header
    _
  $region3: #{gfixed_layer2_forward.4} parent=0 // loop_header
    %s14 = sphi 0, %s18
    %p15 = scmp.ge.s32.totalorder %s14, 4
    %s21 = sphi 0, %s33
    %s22 = sphi 0, %s29
    %s23 = sphi 0, %s21
    %s24 = sphi 0, %s22
    %s25 = sphi 0, %s23
    %s26 = sphi 0, %s24
    %s38 = sphi 0, %s40
    %s41 = sphi 0, %s38
    %s42 = sphi 0, %s41
    %s58 = sphi 0, %s42
    %s62 = sphi 0, %s62
    %s64 = sphi 0, %s62
    %s65 = sphi 0, %s64
    %s79 = sphi 0, %s65
    %s83 = sphi 0, %s83
    %s85 = sphi 0, %s83
    %s86 = sphi 0, %s85
    %s100 = sphi 0, %s86
    %s104 = sphi 0, %s104
    %s106 = sphi 0, %s104
    %s107 = sphi 0, %s106
    %s121 = sphi 0, %s107
    %s129 = sphi 0, %s131
    %s132 = sphi 0, %s129
    %s133 = sphi 0, %s132
    %s149 = sphi 0, %s133
    %s153 = sphi 0, %s153
    %s155 = sphi 0, %s153
    %s156 = sphi 0, %s155
    %s170 = sphi 0, %s156
    %s178 = sphi 0, %s180
    %s181 = sphi 0, %s178
    %s182 = sphi 0, %s181
    %s198 = sphi 0, %s182
    %s206 = sphi 0, %s208
    %s209 = sphi 0, %s206
    %s210 = sphi 0, %s209
    %s226 = sphi 0, %s210
  $region4: #{gfixed_layer2_forward.4} parent=0 // loop_header_branch
    %17 = sbr.rel (%p15) target = $region8
  $region5: #{gfixed_layer2_forward.4} parent=0 // loop_body
    %s19 = ssub.s32 %s14, 1
    %s20 = ssub.s32 %s14, 2
    %s27 = sadd.s32 1, %s22
    %p28 = scmp.ge.s32.totalorder %s27, 1
    %s29 = scalar_select %p28, 0, %s27
    %s30 = sadd.s32 1, %s21
    %s31 = scalar_select %p28, %s30, %s21
    %p32 = scmp.ge.s32.totalorder %s31, 2
    %s33 = scalar_select %p32, 0, %s31
    %s34 = ssub.s32 %s21, %s33
    %s35 = ssub.s32 %s22, %s29
    %s36 = sor.u32 %s34, %s35
    %p37 = scmp.eq.s32.totalorder %s36, 0
    %s39 = sadd.s32 %s38, 1
    %s40 = scalar_select %p37, %s38, %s39
    %p43 = pneg %p37
    %p44 = scmp.eq.s32.totalorder %s14, 1
    %p45 = por %p43, %p44
    %p46 = scmp.ne.s32.totalorder %s38, %s41
    %p47 = scmp.eq.s32.totalorder %s14, 0
    %p48 = por %p46, %p47
    %p49 = scmp.ne.s32.totalorder %s38, %s41
    %p50 = scmp.eq.s32.totalorder %s19, 1
    %p51 = por %p49, %p50
    %p52 = scmp.ne.s32.totalorder %s41, %s42
    %p53 = scmp.eq.s32.totalorder %s19, 0
    %p54 = por %p52, %p53
    %p55 = scmp.ne.s32.totalorder %s41, %s42
    %p56 = scmp.eq.s32.totalorder %s20, 1
    %p57 = por %p55, %p56
    %p59 = scmp.ne.s32.totalorder %s42, %s58
    %p60 = scmp.eq.s32.totalorder %s20, 0
    %p61 = por %p59, %p60
    %s63 = sadd.s32 %s62, 1
    %p66 = scmp.eq.s32.totalorder %s14, 1
    %p67 = scmp.ne.s32.totalorder %s62, %s64
    %p68 = scmp.eq.s32.totalorder %s14, 0
    %p69 = por %p67, %p68
    %p70 = scmp.ne.s32.totalorder %s62, %s64
    %p71 = scmp.eq.s32.totalorder %s19, 1
    %p72 = por %p70, %p71
    %p73 = scmp.ne.s32.totalorder %s64, %s65
    %p74 = scmp.eq.s32.totalorder %s19, 0
    %p75 = por %p73, %p74
    %p76 = scmp.ne.s32.totalorder %s64, %s65
    %p77 = scmp.eq.s32.totalorder %s20, 1
    %p78 = por %p76, %p77
    %p80 = scmp.ne.s32.totalorder %s65, %s79
    %p81 = scmp.eq.s32.totalorder %s20, 0
    %p82 = por %p80, %p81
    %s84 = sadd.s32 %s83, 1
    %p87 = scmp.eq.s32.totalorder %s14, 1
    %p88 = scmp.ne.s32.totalorder %s83, %s85
    %p89 = scmp.eq.s32.totalorder %s14, 0
    %p90 = por %p88, %p89
    %p91 = scmp.ne.s32.totalorder %s83, %s85
    %p92 = scmp.eq.s32.totalorder %s19, 1
    %p93 = por %p91, %p92
    %p94 = scmp.ne.s32.totalorder %s85, %s86
    %p95 = scmp.eq.s32.totalorder %s19, 0
    %p96 = por %p94, %p95
    %p97 = scmp.ne.s32.totalorder %s85, %s86
    %p98 = scmp.eq.s32.totalorder %s20, 1
    %p99 = por %p97, %p98
    %p101 = scmp.ne.s32.totalorder %s86, %s100
    %p102 = scmp.eq.s32.totalorder %s20, 0
    %p103 = por %p101, %p102
    %s105 = sadd.s32 %s104, 1
    %p108 = scmp.eq.s32.totalorder %s14, 1
    %p109 = scmp.ne.s32.totalorder %s104, %s106
    %p110 = scmp.eq.s32.totalorder %s14, 0
    %p111 = por %p109, %p110
    %p112 = scmp.ne.s32.totalorder %s104, %s106
    %p113 = scmp.eq.s32.totalorder %s19, 1
    %p114 = por %p112, %p113
    %p115 = scmp.ne.s32.totalorder %s106, %s107
    %p116 = scmp.eq.s32.totalorder %s19, 0
    %p117 = por %p115, %p116
    %p118 = scmp.ne.s32.totalorder %s106, %s107
    %p119 = scmp.eq.s32.totalorder %s20, 1
    %p120 = por %p118, %p119
    %p122 = scmp.ne.s32.totalorder %s107, %s121
    %p123 = scmp.eq.s32.totalorder %s20, 0
    %p124 = por %p122, %p123
    %s125 = ssub.s32 %s21, %s33
    %s126 = ssub.s32 %s22, %s29
    %s127 = sor.u32 %s125, %s126
    %p128 = scmp.eq.s32.totalorder %s127, 0
    %s130 = sadd.s32 %s129, 1
    %s131 = scalar_select %p128, %s129, %s130
    %p134 = pneg %p128
    %p135 = scmp.eq.s32.totalorder %s14, 1
    %p136 = por %p134, %p135
    %p137 = scmp.ne.s32.totalorder %s129, %s132
    %p138 = scmp.eq.s32.totalorder %s14, 0
    %p139 = por %p137, %p138
    %p140 = scmp.ne.s32.totalorder %s129, %s132
    %p141 = scmp.eq.s32.totalorder %s19, 1
    %p142 = por %p140, %p141
    %p143 = scmp.ne.s32.totalorder %s132, %s133
    %p144 = scmp.eq.s32.totalorder %s19, 0
    %p145 = por %p143, %p144
    %p146 = scmp.ne.s32.totalorder %s132, %s133
    %p147 = scmp.eq.s32.totalorder %s20, 1
    %p148 = por %p146, %p147
    %p150 = scmp.ne.s32.totalorder %s133, %s149
    %p151 = scmp.eq.s32.totalorder %s20, 0
    %p152 = por %p150, %p151
    %s154 = sadd.s32 %s153, 1
    %p157 = scmp.eq.s32.totalorder %s14, 1
    %p158 = scmp.ne.s32.totalorder %s153, %s155
    %p159 = scmp.eq.s32.totalorder %s14, 0
    %p160 = por %p158, %p159
    %p161 = scmp.ne.s32.totalorder %s153, %s155
    %p162 = scmp.eq.s32.totalorder %s19, 1
    %p163 = por %p161, %p162
    %p164 = scmp.ne.s32.totalorder %s155, %s156
    %p165 = scmp.eq.s32.totalorder %s19, 0
    %p166 = por %p164, %p165
    %p167 = scmp.ne.s32.totalorder %s155, %s156
    %p168 = scmp.eq.s32.totalorder %s20, 1
    %p169 = por %p167, %p168
    %p171 = scmp.ne.s32.totalorder %s156, %s170
    %p172 = scmp.eq.s32.totalorder %s20, 0
    %p173 = por %p171, %p172
    %s174 = ssub.s32 %s21, %s33
    %s175 = ssub.s32 %s22, %s29
    %s176 = sor.u32 %s174, %s175
    %p177 = scmp.eq.s32.totalorder %s176, 0
    %s179 = sadd.s32 %s178, 1
    %s180 = scalar_select %p177, %s178, %s179
    %p183 = pneg %p177
    %p184 = scmp.eq.s32.totalorder %s14, 1
    %p185 = por %p183, %p184
    %p186 = scmp.ne.s32.totalorder %s178, %s181
    %p187 = scmp.eq.s32.totalorder %s14, 0
    %p188 = por %p186, %p187
    %p189 = scmp.ne.s32.totalorder %s178, %s181
    %p190 = scmp.eq.s32.totalorder %s19, 1
    %p191 = por %p189, %p190
    %p192 = scmp.ne.s32.totalorder %s181, %s182
    %p193 = scmp.eq.s32.totalorder %s19, 0
    %p194 = por %p192, %p193
    %p195 = scmp.ne.s32.totalorder %s181, %s182
    %p196 = scmp.eq.s32.totalorder %s20, 1
    %p197 = por %p195, %p196
    %p199 = scmp.ne.s32.totalorder %s182, %s198
    %p200 = scmp.eq.s32.totalorder %s20, 0
    %p201 = por %p199, %p200
    %s202 = ssub.s32 %s21, %s33
    %s203 = ssub.s32 %s22, %s29
    %s204 = sor.u32 %s202, %s203
    %p205 = scmp.eq.s32.totalorder %s204, 0
    %s207 = sadd.s32 %s206, 1
    %s208 = scalar_select %p205, %s206, %s207
    %p211 = pneg %p205
    %p212 = scmp.eq.s32.totalorder %s14, 1
    %p213 = por %p211, %p212
    %p214 = scmp.ne.s32.totalorder %s206, %s209
    %p215 = scmp.eq.s32.totalorder %s14, 0
    %p216 = por %p214, %p215
    %p217 = scmp.ne.s32.totalorder %s206, %s209
    %p218 = scmp.eq.s32.totalorder %s19, 1
    %p219 = por %p217, %p218
    %p220 = scmp.ne.s32.totalorder %s209, %s210
    %p221 = scmp.eq.s32.totalorder %s19, 0
    %p222 = por %p220, %p221
    %p223 = scmp.ne.s32.totalorder %s209, %s210
    %p224 = scmp.eq.s32.totalorder %s20, 1
    %p225 = por %p223, %p224
    %p227 = scmp.ne.s32.totalorder %s210, %s226
    %p228 = scmp.eq.s32.totalorder %s20, 0
    %p229 = por %p227, %p228
    %p230 = scmp.le.s32.totalorder 1, %s14
    %p231 = scmp.lt.s32.totalorder %s14, 3
    %p232 = pnand %p230, %p231
    %p233 = pneg %p232
    // Predicated region
    $region9: #{gfixed_layer2_forward.4} parent=5 // pred_check
      _
    $region10: #{gfixed_layer2_forward.4} parent=5 // pred_check_branch
      %235 = sbr.rel (%p232) target = $region12
    $region11: #{gfixed_layer2_forward.4} parent=5 // pred_region
      %s236 = ssub.s32 %s14, 1
      // Predicated region
      $region13: #{gfixed_layer2_forward.4} parent=11 // pred_check
        %p237 = pneg %p75
      $region14: #{gfixed_layer2_forward.4} parent=11 // pred_check_branch
        %239 = sbr.rel (%p237) target = $region16
      $region15: #{gfixed_layer2_forward.4} parent=11 // pred_region
        _
      $region16: #{gfixed_layer2_forward.4} parent=11 // pred_fallthru
        _
      // Predicated region
      $region17: #{gfixed_layer2_forward.4} parent=11 // pred_check
        %p240 = pneg %p96
      $region18: #{gfixed_layer2_forward.4} parent=11 // pred_check_branch
        %242 = sbr.rel (%p240) target = $region20
      $region19: #{gfixed_layer2_forward.4} parent=11 // pred_region
        _
      $region20: #{gfixed_layer2_forward.4} parent=11 // pred_fallthru
        _
      // Predicated region
      $region21: #{gfixed_layer2_forward.4} parent=11 // pred_check
        %p243 = pneg %p117
      $region22: #{gfixed_layer2_forward.4} parent=11 // pred_check_branch
        %245 = sbr.rel (%p243) target = $region24
      $region23: #{gfixed_layer2_forward.4} parent=11 // pred_region
        _
      $region24: #{gfixed_layer2_forward.4} parent=11 // pred_fallthru
        _
      // Predicated region
      $region25: #{gfixed_layer2_forward.4} parent=11 // pred_check
        %p246 = pneg %p166
      $region26: #{gfixed_layer2_forward.4} parent=11 // pred_check_branch
        %248 = sbr.rel (%p246) target = $region28
      $region27: #{gfixed_layer2_forward.4} parent=11 // pred_region
        _
      $region28: #{gfixed_layer2_forward.4} parent=11 // pred_fallthru
        _
    $region12: #{gfixed_layer2_forward.4} parent=5 // pred_fallthru
      _
    %p249 = scmp.lt.s32.totalorder %s14, 2
    // Predicated region
    $region29: #{gfixed_layer2_forward.4} parent=5 // pred_check
      %p250 = pneg %p249
    $region30: #{gfixed_layer2_forward.4} parent=5 // pred_check_branch
      %252 = sbr.rel (%p250) target = $region32
    $region31: #{gfixed_layer2_forward.4} parent=5 // pred_region
      // Predicated region
      $region33: #{gfixed_layer2_forward.4} parent=31 // pred_check
        %p253 = pneg %p48
      $region34: #{gfixed_layer2_forward.4} parent=31 // pred_check_branch
        %255 = sbr.rel (%p253) target = $region36
      $region35: #{gfixed_layer2_forward.4} parent=31 // pred_region
        %s256 = smul.u32 2, %s22
        %p257 = scmp.lt.s32.totalorder %s21, 1
        %s258 = scalar_select %p257, %s21, 1
        %p259 = scmp.lt.s32.totalorder %s256, 1
        %s260 = scalar_select %p259, %s256, 1
        %s261 = smul.addr %s258, 2
        %s262 = sadd.s32 %s260, %s261
        %s263 = smul.addr %s262, 8
        %s264 = scalar_lea.vmem %s0, %s263
        %s265 = smul.u32 2, %s22
      $region36: #{gfixed_layer2_forward.4} parent=31 // pred_fallthru
        _
      // Predicated region
      $region37: #{gfixed_layer2_forward.4} parent=31 // pred_check
        %p266 = pneg %p139
      $region38: #{gfixed_layer2_forward.4} parent=31 // pred_check_branch
        %268 = sbr.rel (%p266) target = $region40
      $region39: #{gfixed_layer2_forward.4} parent=31 // pred_region
        %s269 = smul.u32 2, %s22
        %p270 = scmp.lt.s32.totalorder %s21, 1
        %s271 = scalar_select %p270, %s21, 1
        %p272 = scmp.lt.s32.totalorder %s269, 1
        %s273 = scalar_select %p272, %s269, 1
        %s274 = smul.addr %s271, 2
        %s275 = sadd.s32 %s273, %s274
        %s276 = smul.addr %s275, 8
        %s277 = scalar_lea.vmem %s4, %s276
        %s278 = smul.u32 2, %s22
      $region40: #{gfixed_layer2_forward.4} parent=31 // pred_fallthru
        _
    $region32: #{gfixed_layer2_forward.4} parent=5 // pred_fallthru
      _
    %p279 = scmp.le.s32.totalorder 1, %s14
    %p280 = scmp.lt.s32.totalorder %s14, 3
    %p281 = pnand %p279, %p280
    %p282 = pneg %p281
    // Predicated region
    $region41: #{gfixed_layer2_forward.4} parent=5 // pred_check
      _
    $region42: #{gfixed_layer2_forward.4} parent=5 // pred_check_branch
      %284 = sbr.rel (%p281) target = $region44
    $region43: #{gfixed_layer2_forward.4} parent=5 // pred_region
      %s285 = ssub.s32 %s14, 1
      %s286 = smul.u32 2, %s24
      %p287 = scmp.lt.s32.totalorder %s23, 1
      %s288 = scalar_select %p287, %s23, 1
      %p289 = scmp.lt.s32.totalorder %s286, 1
      %s290 = scalar_select %p289, %s286, 1
      %s291 = smul.addr %s288, 2
      %s292 = sadd.s32 %s290, %s291
      %s293 = smul.addr %s292, 8
      %s294 = scalar_lea.vmem %s0, %s293
      %p295 = pneg %p54
      %p296 = pneg %p51
      %p297 = pneg %p75
      %p298 = pneg %p72
      %p299 = pneg %p96
      %p300 = pneg %p93
      %p301 = pneg %p117
      %p302 = pneg %p114
      %s303 = smul.u32 2, %s24
      %p304 = scmp.lt.s32.totalorder %s23, 1
      %s305 = scalar_select %p304, %s23, 1
      %p306 = scmp.lt.s32.totalorder %s303, 1
      %s307 = scalar_select %p306, %s303, 1
      %s308 = smul.addr %s305, 2
      %s309 = sadd.s32 %s307, %s308
      %s310 = smul.addr %s309, 8
      %s311 = scalar_lea.vmem %s4, %s310
      %p312 = pneg %p145
      %p313 = pneg %p142
      %p314 = pneg %p166
      %p315 = pneg %p163
      %p316 = pneg %p194
      %p317 = pneg %p191
      %s318 = smul.u32 2, %s24
      %p319 = scmp.lt.s32.totalorder %s23, 1
      %s320 = scalar_select %p319, %s23, 1
      %p321 = scmp.lt.s32.totalorder %s318, 1
      %s322 = scalar_select %p321, %s318, 1
      %s323 = smul.addr %s320, 2
      %s324 = sadd.s32 %s322, %s323
      %s325 = smul.addr %s324, 8
      %s326 = scalar_lea.vmem %s6, %s325
      %p327 = pneg %p222
      %p328 = pneg %p219
      %p329 = scmp.lt.s32.totalorder %s23, 1
      %s330 = scalar_select %p329, %s23, 1
      %p331 = scmp.lt.s32.totalorder %s24, 0
      %s332 = scalar_select %p331, %s24, 0
      %s333 = sadd.s32 %s332, %s330
      %s334 = smul.addr %s333, 8
      %s335 = scalar_lea.vmem %s7, %s334
      %s336 = smul.u32 2, %s24
      %p337 = scmp.lt.s32.totalorder %s23, 1
      %s338 = scalar_select %p337, %s23, 1
      %p339 = scmp.lt.s32.totalorder %s336, 1
      %s340 = scalar_select %p339, %s336, 1
      %s341 = smul.addr %s338, 2
      %s342 = sadd.s32 %s340, %s341
      %s343 = smul.addr %s342, 8
      %s344 = scalar_lea.vmem %s0, %s343
      %s345 = smul.u32 2, %s24
      %s346 = smul.u32 2, %s24
      %p347 = scmp.lt.s32.totalorder %s23, 1
      %s348 = scalar_select %p347, %s23, 1
      %p349 = scmp.lt.s32.totalorder %s346, 1
      %s350 = scalar_select %p349, %s346, 1
      %s351 = smul.addr %s348, 2
      %s352 = sadd.s32 %s350, %s351
      %s353 = smul.addr %s352, 8
      %s354 = scalar_lea.vmem %s4, %s353
      %s355 = smul.u32 2, %s24
      %s356 = smul.u32 2, %s24
      %p357 = scmp.lt.s32.totalorder %s23, 1
      %s358 = scalar_select %p357, %s23, 1
      %p359 = scmp.lt.s32.totalorder %s356, 1
      %s360 = scalar_select %p359, %s356, 1
      %s361 = smul.addr %s358, 2
      %s362 = sadd.s32 %s360, %s361
      %s363 = smul.addr %s362, 8
      %s364 = scalar_lea.vmem %s6, %s363
      %s365 = smul.u32 2, %s24
      %p366 = scmp.lt.s32.totalorder %s23, 1
      %s367 = scalar_select %p366, %s23, 1
      %p368 = scmp.lt.s32.totalorder %s24, 0
      %s369 = scalar_select %p368, %s24, 0
      %s370 = sadd.s32 %s369, %s367
      %s371 = smul.addr %s370, 8
      %s372 = scalar_lea.vmem %s7, %s371
      %v373 = vld [vmem:[%s1] sm:$0xff]
      %v374 = vld [vmem:[%s344] sm:$0xff]
      %v375 = vld [vmem:[%s344 + $0x8] sm:$0xff]
      %377 = vset.pattern.permute.xlu0 0
      %378 = vperm.xlu0 %377, %v373
      %v379 = vpop.permute.xlu0 %378
      %v381 = vmul.f32 %v379, %v374
      %v382 = vmul.f32 %v379, %v375
      %v383 = vld [vmem:[%s2] sm:$0xff]
      %385 = vset.pattern.permute.xlu0 0
      %386 = vperm.xlu0 %385, %v383
      %v387 = vpop.permute.xlu0 %386
      %v389 = vadd.f32 %v381, %v387
      %v390 = vadd.f32 %v382, %v387
      %v391 = vmax.f32 %v389, 0.0
      %v392 = vmax.f32 %v390, 0.0
      %v393 = vld [vmem:[%s3] sm:$0xff]
      %v394 = vld [vmem:[%s5] sm:$0xff]
      %v395 = vld [vmem:[%s354] sm:$0xff]
      %v396 = vld [vmem:[%s354 + $0x8] sm:$0xff]
      %vm397 = vcmask 64512
      %v399 = vsel %vm397, %v394, 0
      %401 = vmatprep.subr.mxu0 %v396
      %402 = vmatpush1.msra.mxu0 %v395
      %403 = vmatprep.subr.mxu0 0.0
      %404 = vmatpush1.msra.mxu0 0.0
      %405 = vmatprep.subr.mxu0 0.0
      %406 = vmatpush1.msra.mxu0 0.0
      %407 = vmatprep.subr.mxu0 0.0
      %408 = vmatpush1.msra.mxu0 0.0
      %409 = vmatprep.subr.mxu0 0.0
      %410 = vmatpush1.msra.mxu0 0.0
      %411 = vmatprep.subr.mxu0 0.0
      %412 = vmatpush1.msra.mxu0 0.0
      %413 = vmatprep.subr.mxu0 0.0
      %414 = vmatpush1.msra.mxu0 0.0
      %415 = vmatprep.subr.mxu0 0.0
      %416 = vmatpush1.msra.mxu0 0.0
      %417 = vmatprep.subr.mxu0 0.0
      %418 = vmatpush1.msra.mxu0 0.0
      %419 = vmatprep.subr.mxu0 0.0
      %420 = vmatpush1.msra.mxu0 0.0
      %421 = vmatprep.subr.mxu0 0.0
      %422 = vmatpush1.msra.mxu0 0.0
      %423 = vmatprep.subr.mxu0 0.0
      %424 = vmatpush1.msra.mxu0 0.0
      %425 = vmatprep.subr.mxu0 0.0
      %426 = vmatpush1.msra.mxu0 0.0
      %427 = vmatprep.subr.mxu0 0.0
      %428 = vmatpush1.msra.mxu0 0.0
      %429 = vmatprep.subr.mxu0 0.0
      %430 = vmatpush1.msra.mxu0 0.0
      %431 = vmatprep.subr.mxu0 0.0
      %432 = vmatpush1.msra.mxu0 0.0
      %433 = vmatprep.subr.mxu0 0.0
      %434 = vmatpush1.msra.mxu0 0.0
      %435 = vmatprep.subr.mxu0 0.0
      %436 = vmatpush1.msra.mxu0 0.0
      %437 = vmatprep.subr.mxu0 0.0
      %438 = vmatpush1.msra.mxu0 0.0
      %439 = vmatprep.subr.mxu0 0.0
      %440 = vmatpush1.msra.mxu0 0.0
      %441 = vmatprep.subr.mxu0 0.0
      %442 = vmatpush1.msra.mxu0 0.0
      %443 = vmatprep.subr.mxu0 0.0
      %444 = vmatpush1.msra.mxu0 0.0
      %445 = vmatprep.subr.mxu0 0.0
      %446 = vmatpush1.msra.mxu0 0.0
      %447 = vmatprep.subr.mxu0 0.0
      %448 = vmatpush1.msra.mxu0 0.0
      %449 = vmatprep.subr.mxu0 0.0
      %450 = vmatpush1.msra.mxu0 0.0
      %451 = vmatprep.subr.mxu0 0.0
      %452 = vmatpush1.msra.mxu0 0.0
      %453 = vmatprep.subr.mxu0 0.0
      %454 = vmatpush1.msra.mxu0 0.0
      %455 = vmatprep.subr.mxu0 0.0
      %456 = vmatpush1.msra.mxu0 0.0
      %457 = vmatprep.subr.mxu0 0.0
      %458 = vmatpush1.msra.mxu0 0.0
      %459 = vmatprep.subr.mxu0 0.0
      %460 = vmatpush1.msra.mxu0 0.0
      %461 = vmatprep.subr.mxu0 0.0
      %462 = vmatpush1.msra.mxu0 0.0
      %463 = vmatprep.subr.mxu0 0.0
      %464 = vmatpush1.msra.mxu0 0.0
      %465 = vmatprep.mubr.f32.mxu0 0.0
      %466 = vmatmul.mubr.f32.gmra.mrb[0].mxu0 %v399
      %v467 = vpop.f32.mrb[0].mxu0
      %v468 = vadd.f32 0.0, %v467
      %v469 = vpop.f32.mrb[0].mxu0
      %v470 = vadd.f32 0.0, %v469
      %471 = vdwg.mxu0
      %v473 = vsel %vm397, %v393, 0
      %475 = vmatprep.subr.mxu0 %v392
      %476 = vmatpush1.msra.mxu0 %v391
      %477 = vmatprep.subr.mxu0 0.0
      %478 = vmatpush1.msra.mxu0 0.0
      %479 = vmatprep.subr.mxu0 0.0
      %480 = vmatpush1.msra.mxu0 0.0
      %481 = vmatprep.subr.mxu0 0.0
      %482 = vmatpush1.msra.mxu0 0.0
      %483 = vmatprep.subr.mxu0 0.0
      %484 = vmatpush1.msra.mxu0 0.0
      %485 = vmatprep.subr.mxu0 0.0
      %486 = vmatpush1.msra.mxu0 0.0
      %487 = vmatprep.subr.mxu0 0.0
      %488 = vmatpush1.msra.mxu0 0.0
      %489 = vmatprep.subr.mxu0 0.0
      %490 = vmatpush1.msra.mxu0 0.0
      %491 = vmatprep.subr.mxu0 0.0
      %492 = vmatpush1.msra.mxu0 0.0
      %493 = vmatprep.subr.mxu0 0.0
      %494 = vmatpush1.msra.mxu0 0.0
      %495 = vmatprep.subr.mxu0 0.0
      %496 = vmatpush1.msra.mxu0 0.0
      %497 = vmatprep.subr.mxu0 0.0
      %498 = vmatpush1.msra.mxu0 0.0
      %499 = vmatprep.subr.mxu0 0.0
      %500 = vmatpush1.msra.mxu0 0.0
      %501 = vmatprep.subr.mxu0 0.0
      %502 = vmatpush1.msra.mxu0 0.0
      %503 = vmatprep.subr.mxu0 0.0
      %504 = vmatpush1.msra.mxu0 0.0
      %505 = vmatprep.subr.mxu0 0.0
      %506 = vmatpush1.msra.mxu0 0.0
      %507 = vmatprep.subr.mxu0 0.0
      %508 = vmatpush1.msra.mxu0 0.0
      %509 = vmatprep.subr.mxu0 0.0
      %510 = vmatpush1.msra.mxu0 0.0
      %511 = vmatprep.subr.mxu0 0.0
      %512 = vmatpush1.msra.mxu0 0.0
      %513 = vmatprep.subr.mxu0 0.0
      %514 = vmatpush1.msra.mxu0 0.0
      %515 = vmatprep.subr.mxu0 0.0
      %516 = vmatpush1.msra.mxu0 0.0
      %517 = vmatprep.subr.mxu0 0.0
      %518 = vmatpush1.msra.mxu0 0.0
      %519 = vmatprep.subr.mxu0 0.0
      %520 = vmatpush1.msra.mxu0 0.0
      %521 = vmatprep.subr.mxu0 0.0
      %522 = vmatpush1.msra.mxu0 0.0
      %523 = vmatprep.subr.mxu0 0.0
      %524 = vmatpush1.msra.mxu0 0.0
      %525 = vmatprep.subr.mxu0 0.0
      %526 = vmatpush1.msra.mxu0 0.0
      %527 = vmatprep.subr.mxu0 0.0
      %528 = vmatpush1.msra.mxu0 0.0
      %529 = vmatprep.subr.mxu0 0.0
      %530 = vmatpush1.msra.mxu0 0.0
      %531 = vmatprep.subr.mxu0 0.0
      %532 = vmatpush1.msra.mxu0 0.0
      %533 = vmatprep.subr.mxu0 0.0
      %534 = vmatpush1.msra.mxu0 0.0
      %535 = vmatprep.subr.mxu0 0.0
      %536 = vmatpush1.msra.mxu0 0.0
      %537 = vmatprep.subr.mxu0 0.0
      %538 = vmatpush1.msra.mxu0 0.0
      %539 = vmatprep.mubr.f32.mxu0 0.0
      %540 = vmatmul.mubr.f32.gmra.mrb[0].mxu0 %v473
      %v541 = vpop.f32.mrb[0].mxu0
      %v542 = vadd.f32 %v468, %v541
      %v543 = vpop.f32.mrb[0].mxu0
      %v544 = vadd.f32 %v470, %v543
      %545 = vdwg.mxu0
      %v546 = vmax.f32 %v542, 0.0
      %v547 = vmax.f32 %v544, 0.0
      %548 = vst [vmem:[%s364] sm:$0xff] %v546
      %549 = vst [vmem:[%s364 + $0x8] sm:$0xff] %v547
      %v550 = vadd.f32 %v546, %v547
      %551 = vadd.xlane.f32.xlu0 %v550
      %v552 = vpop.xlane.xlu0 %551
      %vm553 = vcmask 7168
      %554 = vst.msk [vmem:[%s372] sm:$0xff] %vm553, %v552
      %v555 = vmul.f32 %v546, %v546
      %v556 = vmul.f32 %v547, %v547
      %v557 = vadd.f32 %v555, %v556
      %558 = vadd.xlane.f32.xlu0 %v557
      %v559 = vpop.xlane.xlu0 %558
      %vm560 = vcmask 15368
      %561 = vst.msk [vmem:[%s372] sm:$0xff] %vm560, %v559
      %s562 = smul.u32 2, %s24
      %p563 = scmp.lt.s32.totalorder %s23, 1
      %s564 = scalar_select %p563, %s23, 1
      %p565 = scmp.lt.s32.totalorder %s562, 1
      %s566 = scalar_select %p565, %s562, 1
      %s567 = smul.addr %s564, 2
      %s568 = sadd.s32 %s566, %s567
      %s569 = smul.addr %s568, 8
      %s570 = scalar_lea.vmem %s6, %s569
      %p571 = scmp.lt.s32.totalorder %s23, 1
      %s572 = scalar_select %p571, %s23, 1
      %p573 = scmp.lt.s32.totalorder %s24, 0
      %s574 = scalar_select %p573, %s24, 0
      %s575 = sadd.s32 %s574, %s572
      %s576 = smul.addr %s575, 8
      %s577 = scalar_lea.vmem %s7, %s576
      // Predicated region
      $region45: #{gfixed_layer2_forward.4} parent=43 // pred_check
        %p578 = pneg %p191
      $region46: #{gfixed_layer2_forward.4} parent=43 // pred_check_branch
        %580 = sbr.rel (%p578) target = $region48
      $region47: #{gfixed_layer2_forward.4} parent=43 // pred_region
        %s581 = smul.u32 2, %s24
      $region48: #{gfixed_layer2_forward.4} parent=43 // pred_fallthru
        _
      // Predicated region
      $region49: #{gfixed_layer2_forward.4} parent=43 // pred_check
        %p582 = pneg %p219
      $region50: #{gfixed_layer2_forward.4} parent=43 // pred_check_branch
        %584 = sbr.rel (%p582) target = $region52
      $region51: #{gfixed_layer2_forward.4} parent=43 // pred_region
        _
      $region52: #{gfixed_layer2_forward.4} parent=43 // pred_fallthru
        _
    $region44: #{gfixed_layer2_forward.4} parent=5 // pred_fallthru
      _
    %p585 = scmp.le.s32.totalorder 2, %s14
    // Predicated region
    $region53: #{gfixed_layer2_forward.4} parent=5 // pred_check
      %p586 = pneg %p585
    $region54: #{gfixed_layer2_forward.4} parent=5 // pred_check_branch
      %588 = sbr.rel (%p586) target = $region56
    $region55: #{gfixed_layer2_forward.4} parent=5 // pred_region
      %s589 = ssub.s32 %s14, 2
      // Predicated region
      $region57: #{gfixed_layer2_forward.4} parent=55 // pred_check
        %p590 = pneg %p197
      $region58: #{gfixed_layer2_forward.4} parent=55 // pred_check_branch
        %592 = sbr.rel (%p590) target = $region60
      $region59: #{gfixed_layer2_forward.4} parent=55 // pred_region
        %s593 = smul.u32 2, %s26
        %p594 = scmp.lt.s32.totalorder %s25, 1
        %s595 = scalar_select %p594, %s25, 1
        %p596 = scmp.lt.s32.totalorder %s593, 1
        %s597 = scalar_select %p596, %s593, 1
        %s598 = smul.addr %s595, 2
        %s599 = sadd.s32 %s597, %s598
        %s600 = smul.addr %s599, 8
        %s601 = scalar_lea.vmem %s6, %s600
      $region60: #{gfixed_layer2_forward.4} parent=55 // pred_fallthru
        _
      // Predicated region
      $region61: #{gfixed_layer2_forward.4} parent=55 // pred_check
        %p602 = pneg %p225
      $region62: #{gfixed_layer2_forward.4} parent=55 // pred_check_branch
        %604 = sbr.rel (%p602) target = $region64
      $region63: #{gfixed_layer2_forward.4} parent=55 // pred_region
        %p605 = scmp.lt.s32.totalorder %s25, 1
        %s606 = scalar_select %p605, %s25, 1
        %p607 = scmp.lt.s32.totalorder %s26, 0
        %s608 = scalar_select %p607, %s26, 0
        %s609 = sadd.s32 %s608, %s606
        %s610 = smul.addr %s609, 8
        %s611 = scalar_lea.vmem %s7, %s610
      $region64: #{gfixed_layer2_forward.4} parent=55 // pred_fallthru
        _
    $region56: #{gfixed_layer2_forward.4} parent=5 // pred_fallthru
      _
  $region6: #{gfixed_layer2_forward.4} parent=0 // loop_footer
    %s18 = sadd.s32 1, %s14
  $region7: #{gfixed_layer2_forward.4} parent=0 // loop_footer_branch
    %13 = sbr.rel target = $region3
  $region8: #{gfixed_layer2_forward.4} parent=0 // loop_exit
    _

// kernel: gfixed_layer2_forward.3
$region0: #{gfixed_layer2_forward.3}
  #allocation0 [shape = 'u32[]', space=smem, size = 0x4, offset = 0x4, fixed_abs, tag = 'smem constant byte address 0x4 - core index']
  #allocation1 [shape = 'u32[144,128]{1,0:T(1,128)}', space=vmem, size = 0x12000, scoped, tag = 'internal scratch']
  %s0 = inlined_call_operand.vmem [shape: f32[9,8,8], index: 0, kind: input, shape index: {}]
  %s1 = inlined_call_operand.vmem [shape: f32[8,1], index: 1, kind: input, shape index: {}]
  %s2 = inlined_call_operand.vmem [shape: f32[2,1,8,384], index: 2, kind: input, shape index: {}]
  %s3 = inlined_call_operand.vmem [shape: f32[2,8,256], index: 3, kind: output, shape index: {0}]
  %s4 = inlined_call_operand.vmem [shape: f32[2,1,8,2], index: 4, kind: output, shape index: {1}]
  %5 = xla_tuple %s3, %s4
  %s6 = sld [smem:[#allocation0]]
  $region53: #{gfixed_layer2_forward.3} parent=0
    _
  %s8 = ssub.s32 1, %s6
  %s9 = scalar_select 0, %s8, %s6
  loop: start=0, step=1, limit=4
  $region2: #{gfixed_layer2_forward.3} parent=0 // loop_pre_header
    _
  $region3: #{gfixed_layer2_forward.3} parent=0 // loop_header
    %s11 = sphi 0, %s15
    %p12 = scmp.ge.s32.totalorder %s11, 4
    %s18 = sphi 0, %s30
    %s19 = sphi 0, %s26
    %s20 = sphi 0, %s18
    %s21 = sphi 0, %s19
    %s22 = sphi 0, %s20
    %s23 = sphi 0, %s21
    %s31 = sphi 0, %s31
    %s33 = sphi 0, %s31
    %s34 = sphi 0, %s33
    %s48 = sphi 0, %s34
    %s52 = sphi 0, %s52
    %s54 = sphi 0, %s52
    %s55 = sphi 0, %s54
    %s69 = sphi 0, %s55
    %s77 = sphi 0, %s79
    %s80 = sphi 0, %s77
    %s81 = sphi 0, %s80
    %s97 = sphi 0, %s81
    %s105 = sphi 0, %s107
    %s108 = sphi 0, %s105
    %s109 = sphi 0, %s108
    %s125 = sphi 0, %s109
    %s133 = sphi 0, %s135
    %s136 = sphi 0, %s133
    %s137 = sphi 0, %s136
    %s153 = sphi 0, %s137
  $region4: #{gfixed_layer2_forward.3} parent=0 // loop_header_branch
    %14 = sbr.rel (%p12) target = $region8
  $region5: #{gfixed_layer2_forward.3} parent=0 // loop_body
    %s16 = ssub.s32 %s11, 1
    %s17 = ssub.s32 %s11, 2
    %s24 = sadd.s32 1, %s19
    %p25 = scmp.ge.s32.totalorder %s24, 1
    %s26 = scalar_select %p25, 0, %s24
    %s27 = sadd.s32 1, %s18
    %s28 = scalar_select %p25, %s27, %s18
    %p29 = scmp.ge.s32.totalorder %s28, 2
    %s30 = scalar_select %p29, 0, %s28
    %s32 = sadd.s32 %s31, 1
    %p35 = scmp.eq.s32.totalorder %s11, 1
    %p36 = scmp.ne.s32.totalorder %s31, %s33
    %p37 = scmp.eq.s32.totalorder %s11, 0
    %p38 = por %p36, %p37
    %p39 = scmp.ne.s32.totalorder %s31, %s33
    %p40 = scmp.eq.s32.totalorder %s16, 1
    %p41 = por %p39, %p40
    %p42 = scmp.ne.s32.totalorder %s33, %s34
    %p43 = scmp.eq.s32.totalorder %s16, 0
    %p44 = por %p42, %p43
    %p45 = scmp.ne.s32.totalorder %s33, %s34
    %p46 = scmp.eq.s32.totalorder %s17, 1
    %p47 = por %p45, %p46
    %p49 = scmp.ne.s32.totalorder %s34, %s48
    %p50 = scmp.eq.s32.totalorder %s17, 0
    %p51 = por %p49, %p50
    %s53 = sadd.s32 %s52, 1
    %p56 = scmp.eq.s32.totalorder %s11, 1
    %p57 = scmp.ne.s32.totalorder %s52, %s54
    %p58 = scmp.eq.s32.totalorder %s11, 0
    %p59 = por %p57, %p58
    %p60 = scmp.ne.s32.totalorder %s52, %s54
    %p61 = scmp.eq.s32.totalorder %s16, 1
    %p62 = por %p60, %p61
    %p63 = scmp.ne.s32.totalorder %s54, %s55
    %p64 = scmp.eq.s32.totalorder %s16, 0
    %p65 = por %p63, %p64
    %p66 = scmp.ne.s32.totalorder %s54, %s55
    %p67 = scmp.eq.s32.totalorder %s17, 1
    %p68 = por %p66, %p67
    %p70 = scmp.ne.s32.totalorder %s55, %s69
    %p71 = scmp.eq.s32.totalorder %s17, 0
    %p72 = por %p70, %p71
    %s73 = ssub.s32 %s18, %s30
    %s74 = ssub.s32 %s19, %s26
    %s75 = sor.u32 %s73, %s74
    %p76 = scmp.eq.s32.totalorder %s75, 0
    %s78 = sadd.s32 %s77, 1
    %s79 = scalar_select %p76, %s77, %s78
    %p82 = pneg %p76
    %p83 = scmp.eq.s32.totalorder %s11, 1
    %p84 = por %p82, %p83
    %p85 = scmp.ne.s32.totalorder %s77, %s80
    %p86 = scmp.eq.s32.totalorder %s11, 0
    %p87 = por %p85, %p86
    %p88 = scmp.ne.s32.totalorder %s77, %s80
    %p89 = scmp.eq.s32.totalorder %s16, 1
    %p90 = por %p88, %p89
    %p91 = scmp.ne.s32.totalorder %s80, %s81
    %p92 = scmp.eq.s32.totalorder %s16, 0
    %p93 = por %p91, %p92
    %p94 = scmp.ne.s32.totalorder %s80, %s81
    %p95 = scmp.eq.s32.totalorder %s17, 1
    %p96 = por %p94, %p95
    %p98 = scmp.ne.s32.totalorder %s81, %s97
    %p99 = scmp.eq.s32.totalorder %s17, 0
    %p100 = por %p98, %p99
    %s101 = ssub.s32 %s18, %s30
    %s102 = ssub.s32 %s19, %s26
    %s103 = sor.u32 %s101, %s102
    %p104 = scmp.eq.s32.totalorder %s103, 0
    %s106 = sadd.s32 %s105, 1
    %s107 = scalar_select %p104, %s105, %s106
    %p110 = pneg %p104
    %p111 = scmp.eq.s32.totalorder %s11, 1
    %p112 = por %p110, %p111
    %p113 = scmp.ne.s32.totalorder %s105, %s108
    %p114 = scmp.eq.s32.totalorder %s11, 0
    %p115 = por %p113, %p114
    %p116 = scmp.ne.s32.totalorder %s105, %s108
    %p117 = scmp.eq.s32.totalorder %s16, 1
    %p118 = por %p116, %p117
    %p119 = scmp.ne.s32.totalorder %s108, %s109
    %p120 = scmp.eq.s32.totalorder %s16, 0
    %p121 = por %p119, %p120
    %p122 = scmp.ne.s32.totalorder %s108, %s109
    %p123 = scmp.eq.s32.totalorder %s17, 1
    %p124 = por %p122, %p123
    %p126 = scmp.ne.s32.totalorder %s109, %s125
    %p127 = scmp.eq.s32.totalorder %s17, 0
    %p128 = por %p126, %p127
    %s129 = ssub.s32 %s18, %s30
    %s130 = ssub.s32 %s19, %s26
    %s131 = sor.u32 %s129, %s130
    %p132 = scmp.eq.s32.totalorder %s131, 0
    %s134 = sadd.s32 %s133, 1
    %s135 = scalar_select %p132, %s133, %s134
    %p138 = pneg %p132
    %p139 = scmp.eq.s32.totalorder %s11, 1
    %p140 = por %p138, %p139
    %p141 = scmp.ne.s32.totalorder %s133, %s136
    %p142 = scmp.eq.s32.totalorder %s11, 0
    %p143 = por %p141, %p142
    %p144 = scmp.ne.s32.totalorder %s133, %s136
    %p145 = scmp.eq.s32.totalorder %s16, 1
    %p146 = por %p144, %p145
    %p147 = scmp.ne.s32.totalorder %s136, %s137
    %p148 = scmp.eq.s32.totalorder %s16, 0
    %p149 = por %p147, %p148
    %p150 = scmp.ne.s32.totalorder %s136, %s137
    %p151 = scmp.eq.s32.totalorder %s17, 1
    %p152 = por %p150, %p151
    %p154 = scmp.ne.s32.totalorder %s137, %s153
    %p155 = scmp.eq.s32.totalorder %s17, 0
    %p156 = por %p154, %p155
    %p157 = scmp.le.s32.totalorder 1, %s11
    %p158 = scmp.lt.s32.totalorder %s11, 3
    %p159 = pnand %p157, %p158
    %p160 = pneg %p159
    // Predicated region
    $region9: #{gfixed_layer2_forward.3} parent=5 // pred_check
      _
    $region10: #{gfixed_layer2_forward.3} parent=5 // pred_check_branch
      %162 = sbr.rel (%p159) target = $region12
    $region11: #{gfixed_layer2_forward.3} parent=5 // pred_region
      %s163 = ssub.s32 %s11, 1
      // Predicated region
      $region13: #{gfixed_layer2_forward.3} parent=11 // pred_check
        %p164 = pneg %p44
      $region14: #{gfixed_layer2_forward.3} parent=11 // pred_check_branch
        %166 = sbr.rel (%p164) target = $region16
      $region15: #{gfixed_layer2_forward.3} parent=11 // pred_region
        _
      $region16: #{gfixed_layer2_forward.3} parent=11 // pred_fallthru
        _
      // Predicated region
      $region17: #{gfixed_layer2_forward.3} parent=11 // pred_check
        %p167 = pneg %p65
      $region18: #{gfixed_layer2_forward.3} parent=11 // pred_check_branch
        %169 = sbr.rel (%p167) target = $region20
      $region19: #{gfixed_layer2_forward.3} parent=11 // pred_region
        _
      $region20: #{gfixed_layer2_forward.3} parent=11 // pred_fallthru
        _
    $region12: #{gfixed_layer2_forward.3} parent=5 // pred_fallthru
      _
    %p170 = scmp.lt.s32.totalorder %s11, 2
    // Predicated region
    $region21: #{gfixed_layer2_forward.3} parent=5 // pred_check
      %p171 = pneg %p170
    $region22: #{gfixed_layer2_forward.3} parent=5 // pred_check_branch
      %173 = sbr.rel (%p171) target = $region24
    $region23: #{gfixed_layer2_forward.3} parent=5 // pred_region
      // Predicated region
      $region25: #{gfixed_layer2_forward.3} parent=23 // pred_check
        %p174 = pneg %p87
      $region26: #{gfixed_layer2_forward.3} parent=23 // pred_check_branch
        %176 = sbr.rel (%p174) target = $region28
      $region27: #{gfixed_layer2_forward.3} parent=23 // pred_region
        %p177 = scmp.lt.s32.totalorder %s18, 1
        %s178 = scalar_select %p177, %s18, 1
        %p179 = scmp.lt.s32.totalorder %s19, 0
        %s180 = scalar_select %p179, %s19, 0
        %s181 = smul.addr %s180, 3
        %s182 = smul.addr %s178, 3
        %s183 = sadd.s32 %s181, %s182
        %s184 = smul.addr %s183, 8
        %s185 = scalar_lea.vmem %s2, %s184
      $region28: #{gfixed_layer2_forward.3} parent=23 // pred_fallthru
        _
    $region24: #{gfixed_layer2_forward.3} parent=5 // pred_fallthru
      _
    %p186 = scmp.le.s32.totalorder 1, %s11
    %p187 = scmp.lt.s32.totalorder %s11, 3
    %p188 = pnand %p186, %p187
    %p189 = pneg %p188
    // Predicated region
    $region29: #{gfixed_layer2_forward.3} parent=5 // pred_check
      _
    $region30: #{gfixed_layer2_forward.3} parent=5 // pred_check_branch
      %191 = sbr.rel (%p188) target = $region32
    $region31: #{gfixed_layer2_forward.3} parent=5 // pred_region
      %s192 = ssub.s32 %s11, 1
      %p193 = pneg %p44
      %p194 = pneg %p41
      %p195 = pneg %p65
      %p196 = pneg %p62
      %p197 = scmp.lt.s32.totalorder %s20, 1
      %s198 = scalar_select %p197, %s20, 1
      %p199 = scmp.lt.s32.totalorder %s21, 0
      %s200 = scalar_select %p199, %s21, 0
      %s201 = smul.addr %s200, 3
      %s202 = smul.addr %s198, 3
      %s203 = sadd.s32 %s201, %s202
      %s204 = smul.addr %s203, 8
      %s205 = scalar_lea.vmem %s2, %s204
      %p206 = pneg %p93
      %p207 = pneg %p90
      %p208 = pneg %p121
      %p209 = pneg %p118
      %s210 = smul.u32 2, %s21
      %p211 = scmp.lt.s32.totalorder %s20, 1
      %s212 = scalar_select %p211, %s20, 1
      %p213 = scmp.lt.s32.totalorder %s210, 1
      %s214 = scalar_select %p213, %s210, 1
      %s215 = smul.addr %s212, 2
      %s216 = sadd.s32 %s214, %s215
      %s217 = smul.addr %s216, 8
      %s218 = scalar_lea.vmem %s3, %s217
      %p219 = pneg %p149
      %p220 = pneg %p146
      %p221 = scmp.lt.s32.totalorder %s20, 1
      %s222 = scalar_select %p221, %s20, 1
      %p223 = scmp.lt.s32.totalorder %s21, 0
      %s224 = scalar_select %p223, %s21, 0
      %s225 = sadd.s32 %s224, %s222
      %s226 = smul.addr %s225, 8
      %s227 = scalar_lea.vmem %s4, %s226
      %p228 = scmp.lt.s32.totalorder %s20, 1
      %s229 = scalar_select %p228, %s20, 1
      %p230 = scmp.lt.s32.totalorder %s21, 0
      %s231 = scalar_select %p230, %s21, 0
      %s232 = smul.addr %s231, 3
      %s233 = smul.addr %s229, 3
      %s234 = sadd.s32 %s232, %s233
      %s235 = smul.addr %s234, 8
      %s236 = scalar_lea.vmem %s2, %s235
      %s237 = smul.u32 2, %s21
      %p238 = scmp.lt.s32.totalorder %s20, 1
      %s239 = scalar_select %p238, %s20, 1
      %p240 = scmp.lt.s32.totalorder %s237, 1
      %s241 = scalar_select %p240, %s237, 1
      %s242 = smul.addr %s239, 2
      %s243 = sadd.s32 %s241, %s242
      %s244 = smul.addr %s243, 8
      %s245 = scalar_lea.vmem %s3, %s244
      %s246 = smul.u32 2, %s21
      %p247 = scmp.lt.s32.totalorder %s20, 1
      %s248 = scalar_select %p247, %s20, 1
      %p249 = scmp.lt.s32.totalorder %s21, 0
      %s250 = scalar_select %p249, %s21, 0
      %s251 = sadd.s32 %s250, %s248
      %s252 = smul.addr %s251, 8
      %s253 = scalar_lea.vmem %s4, %s252
      %v254 = vlaneseq
      %v255 = vand.u32 %v254, 127
      %v256 = vadd.s32 %v255, 128
      %vm257 = vcmp.lt.s32.totalorder %v255, 0
      %v258 = vsub.s32 0, %v255
      %v259 = vsel %vm257, %v258, %v255
      %v260 = vshrl.u32 %v259, 4
      %v261 = vand.u32 %v259, 15
      %v262 = vsub.s32 0, %v261
      %v263 = vsel %vm257, %v262, %v261
      %vm264 = vcmp.lt.s32.totalorder %v256, 0
      %v265 = vsub.s32 0, %v256
      %v266 = vsel %vm264, %v265, %v256
      %v267 = vshrl.u32 %v266, 4
      %v268 = vand.u32 %v266, 15
      %v269 = vsub.s32 0, %v268
      %v270 = vsel %vm264, %v269, %v268
      %vm271 = vcmp.ne.s32.totalorder %v263, 0
      %vm272 = vcmp.ne.s32.totalorder %v270, 0
      %vm273 = vcmp.lt.s32.totalorder %v263, 0
      %vm274 = vcmp.lt.s32.totalorder %v270, 0
      %vm275 = vmand %vm273, %vm271
      %vm276 = vmand %vm274, %vm272
      %v277 = vadd.s32 %v263, 16
      %v278 = vadd.s32 %v270, 16
      %v279 = vsel %vm275, %v277, %v263
      %v280 = vsel %vm276, %v278, %v270
      %v281 = vld [vmem:[%s236] sm:$0xff]
      %v282 = vld [vmem:[%s236 + $0x8] sm:$0xff]
      %v283 = vadd.s32 %v279, 4294967295
      %v284 = vadd.s32 %v280, 4294967295
      %vm285 = vcmp.ge.s32.totalorder %v283, 0
      %vm286 = vcmp.ge.s32.totalorder %v284, 0
      %vm287 = vcmp.lt.s32.totalorder %v283, 16
      %vm288 = vcmp.lt.s32.totalorder %v284, 16
      %vm289 = vmand %vm285, %vm287
      %vm290 = vmand %vm286, %vm288
      %v291 = vsel %vm289, 1, 0
      %v292 = vsel %vm290, 1, 0
      %vm293 = vcmp.eq.s32.totalorder %v291, 1
      %vm294 = vcmp.eq.s32.totalorder %v292, 1
      %v295 = vsel %vm293, %v281, 0.0
      %v296 = vsel %vm294, %v282, 0.0
      %v297 = vld [vmem:[%s0] sm:$0xff]
      %v298 = vld [vmem:[%s236] sm:$0xff]
      %v299 = vld [vmem:[%s236 + $0x8] sm:$0xff]
      %v300 = vld [vmem:[%s236 + $0x10] sm:$0xff]
      %s301 = scalar_lea.vmem %s0, 8
      %v302 = vld [vmem:[%s301] sm:$0xff]
      %306 = vrot.lane.b32.xlu0 %v298, 127
      %v307 = vpop.permute.xlu0 %306
      %308 = vrot.lane.b32.xlu0 %v299, 127
      %v309 = vpop.permute.xlu0 %308
      %310 = vrot.lane.b32.xlu0 %v300, 127
      %v311 = vpop.permute.xlu0 %310
      %vm312 = vcmask 1039360
      %v313 = vsel %vm312, %v307, %v309
      %v314 = vsel %vm312, %v309, %v311
      %vm317 = vcmask 64512
      %v319 = vsel %vm317, %v302, 0
      %321 = vmatprep.subr.mxu0 %v314
      %322 = vmatpush1.msra.mxu0 %v313
      %323 = vmatprep.subr.mxu0 0.0
      %324 = vmatpush1.msra.mxu0 0.0
      %325 = vmatprep.subr.mxu0 0.0
      %326 = vmatpush1.msra.mxu0 0.0
      %327 = vmatprep.subr.mxu0 0.0
      %328 = vmatpush1.msra.mxu0 0.0
      %329 = vmatprep.subr.mxu0 0.0
      %330 = vmatpush1.msra.mxu0 0.0
      %331 = vmatprep.subr.mxu0 0.0
      %332 = vmatpush1.msra.mxu0 0.0
      %333 = vmatprep.subr.mxu0 0.0
      %334 = vmatpush1.msra.mxu0 0.0
      %335 = vmatprep.subr.mxu0 0.0
      %336 = vmatpush1.msra.mxu0 0.0
      %337 = vmatprep.subr.mxu0 0.0
      %338 = vmatpush1.msra.mxu0 0.0
      %339 = vmatprep.subr.mxu0 0.0
      %340 = vmatpush1.msra.mxu0 0.0
      %341 = vmatprep.subr.mxu0 0.0
      %342 = vmatpush1.msra.mxu0 0.0
      %343 = vmatprep.subr.mxu0 0.0
      %344 = vmatpush1.msra.mxu0 0.0
      %345 = vmatprep.subr.mxu0 0.0
      %346 = vmatpush1.msra.mxu0 0.0
      %347 = vmatprep.subr.mxu0 0.0
      %348 = vmatpush1.msra.mxu0 0.0
      %349 = vmatprep.subr.mxu0 0.0
      %350 = vmatpush1.msra.mxu0 0.0
      %351 = vmatprep.subr.mxu0 0.0
      %352 = vmatpush1.msra.mxu0 0.0
      %353 = vmatprep.subr.mxu0 0.0
      %354 = vmatpush1.msra.mxu0 0.0
      %355 = vmatprep.subr.mxu0 0.0
      %356 = vmatpush1.msra.mxu0 0.0
      %357 = vmatprep.subr.mxu0 0.0
      %358 = vmatpush1.msra.mxu0 0.0
      %359 = vmatprep.subr.mxu0 0.0
      %360 = vmatpush1.msra.mxu0 0.0
      %361 = vmatprep.subr.mxu0 0.0
      %362 = vmatpush1.msra.mxu0 0.0
      %363 = vmatprep.subr.mxu0 0.0
      %364 = vmatpush1.msra.mxu0 0.0
      %365 = vmatprep.subr.mxu0 0.0
      %366 = vmatpush1.msra.mxu0 0.0
      %367 = vmatprep.subr.mxu0 0.0
      %368 = vmatpush1.msra.mxu0 0.0
      %369 = vmatprep.subr.mxu0 0.0
      %370 = vmatpush1.msra.mxu0 0.0
      %371 = vmatprep.subr.mxu0 0.0
      %372 = vmatpush1.msra.mxu0 0.0
      %373 = vmatprep.subr.mxu0 0.0
      %374 = vmatpush1.msra.mxu0 0.0
      %375 = vmatprep.subr.mxu0 0.0
      %376 = vmatpush1.msra.mxu0 0.0
      %377 = vmatprep.subr.mxu0 0.0
      %378 = vmatpush1.msra.mxu0 0.0
      %379 = vmatprep.subr.mxu0 0.0
      %380 = vmatpush1.msra.mxu0 0.0
      %381 = vmatprep.subr.mxu0 0.0
      %382 = vmatpush1.msra.mxu0 0.0
      %383 = vmatprep.subr.mxu0 0.0
      %384 = vmatpush1.msra.mxu0 0.0
      %385 = vmatprep.mubr.f32.mxu0 0.0
      %386 = vmatmul.mubr.f32.gmra.mrb[0].mxu0 %v319
      %v387 = vpop.f32.mrb[0].mxu0
      %v388 = vadd.f32 0.0, %v387
      %v389 = vpop.f32.mrb[0].mxu0
      %v390 = vadd.f32 0.0, %v389
      %391 = vdwg.mxu0
      %v393 = vsel %vm317, %v297, 0
      %395 = vmatprep.subr.mxu0 %v296
      %396 = vmatpush1.msra.mxu0 %v295
      %397 = vmatprep.subr.mxu0 0.0
      %398 = vmatpush1.msra.mxu0 0.0
      %399 = vmatprep.subr.mxu0 0.0
      %400 = vmatpush1.msra.mxu0 0.0
      %401 = vmatprep.subr.mxu0 0.0
      %402 = vmatpush1.msra.mxu0 0.0
      %403 = vmatprep.subr.mxu0 0.0
      %404 = vmatpush1.msra.mxu0 0.0
      %405 = vmatprep.subr.mxu0 0.0
      %406 = vmatpush1.msra.mxu0 0.0
      %407 = vmatprep.subr.mxu0 0.0
      %408 = vmatpush1.msra.mxu0 0.0
      %409 = vmatprep.subr.mxu0 0.0
      %410 = vmatpush1.msra.mxu0 0.0
      %411 = vmatprep.subr.mxu0 0.0
      %412 = vmatpush1.msra.mxu0 0.0
      %413 = vmatprep.subr.mxu0 0.0
      %414 = vmatpush1.msra.mxu0 0.0
      %415 = vmatprep.subr.mxu0 0.0
      %416 = vmatpush1.msra.mxu0 0.0
      %417 = vmatprep.subr.mxu0 0.0
      %418 = vmatpush1.msra.mxu0 0.0
      %419 = vmatprep.subr.mxu0 0.0
      %420 = vmatpush1.msra.mxu0 0.0
      %421 = vmatprep.subr.mxu0 0.0
      %422 = vmatpush1.msra.mxu0 0.0
      %423 = vmatprep.subr.mxu0 0.0
      %424 = vmatpush1.msra.mxu0 0.0
      %425 = vmatprep.subr.mxu0 0.0
      %426 = vmatpush1.msra.mxu0 0.0
      %427 = vmatprep.subr.mxu0 0.0
      %428 = vmatpush1.msra.mxu0 0.0
      %429 = vmatprep.subr.mxu0 0.0
      %430 = vmatpush1.msra.mxu0 0.0
      %431 = vmatprep.subr.mxu0 0.0
      %432 = vmatpush1.msra.mxu0 0.0
      %433 = vmatprep.subr.mxu0 0.0
      %434 = vmatpush1.msra.mxu0 0.0
      %435 = vmatprep.subr.mxu0 0.0
      %436 = vmatpush1.msra.mxu0 0.0
      %437 = vmatprep.subr.mxu0 0.0
      %438 = vmatpush1.msra.mxu0 0.0
      %439 = vmatprep.subr.mxu0 0.0
      %440 = vmatpush1.msra.mxu0 0.0
      %441 = vmatprep.subr.mxu0 0.0
      %442 = vmatpush1.msra.mxu0 0.0
      %443 = vmatprep.subr.mxu0 0.0
      %444 = vmatpush1.msra.mxu0 0.0
      %445 = vmatprep.subr.mxu0 0.0
      %446 = vmatpush1.msra.mxu0 0.0
      %447 = vmatprep.subr.mxu0 0.0
      %448 = vmatpush1.msra.mxu0 0.0
      %449 = vmatprep.subr.mxu0 0.0
      %450 = vmatpush1.msra.mxu0 0.0
      %451 = vmatprep.subr.mxu0 0.0
      %452 = vmatpush1.msra.mxu0 0.0
      %453 = vmatprep.subr.mxu0 0.0
      %454 = vmatpush1.msra.mxu0 0.0
      %455 = vmatprep.subr.mxu0 0.0
      %456 = vmatpush1.msra.mxu0 0.0
      %457 = vmatprep.subr.mxu0 0.0
      %458 = vmatpush1.msra.mxu0 0.0
      %459 = vmatprep.mubr.f32.mxu0 0.0
      %460 = vmatmul.mubr.f32.gmra.mrb[0].mxu0 %v393
      %v461 = vpop.f32.mrb[0].mxu0
      %v462 = vadd.f32 %v388, %v461
      %v463 = vpop.f32.mrb[0].mxu0
      %v464 = vadd.f32 %v390, %v463
      %465 = vdwg.mxu0
      %v466 = vadd.s32 %v279, 1
      %v467 = vadd.s32 %v280, 1
      %vm468 = vcmp.ge.s32.totalorder %v466, 0
      %vm469 = vcmp.ge.s32.totalorder %v467, 0
      %vm470 = vcmp.lt.s32.totalorder %v466, 16
      %vm471 = vcmp.lt.s32.totalorder %v467, 16
      %vm472 = vmand %vm468, %vm470
      %vm473 = vmand %vm469, %vm471
      %v474 = vsel %vm472, 1, 0
      %v475 = vsel %vm473, 1, 0
      %vm476 = vcmp.eq.s32.totalorder %v474, 1
      %vm477 = vcmp.eq.s32.totalorder %v475, 1
      %478 = vrot.lane.b32.xlu0 %v298, 126
      %v479 = vpop.permute.xlu0 %478
      %480 = vrot.lane.b32.xlu0 %v299, 126
      %v481 = vpop.permute.xlu0 %480
      %482 = vrot.lane.b32.xlu0 %v300, 126
      %v483 = vpop.permute.xlu0 %482
      %vm484 = vcmask 1031168
      %v485 = vsel %vm484, %v479, %v481
      %v486 = vsel %vm484, %v481, %v483
      %v489 = vsel %vm476, %v485, 0.0
      %v490 = vsel %vm477, %v486, 0.0
      %s491 = scalar_lea.vmem %s0, 16
      %v492 = vld [vmem:[%s491] sm:$0xff]
      %v494 = vsel %vm317, %v492, 0
      %496 = vmatprep.subr.mxu0 %v490
      %497 = vmatpush1.msra.mxu0 %v489
      %498 = vmatprep.subr.mxu0 0.0
      %499 = vmatpush1.msra.mxu0 0.0
      %500 = vmatprep.subr.mxu0 0.0
      %501 = vmatpush1.msra.mxu0 0.0
      %502 = vmatprep.subr.mxu0 0.0
      %503 = vmatpush1.msra.mxu0 0.0
      %504 = vmatprep.subr.mxu0 0.0
      %505 = vmatpush1.msra.mxu0 0.0
      %506 = vmatprep.subr.mxu0 0.0
      %507 = vmatpush1.msra.mxu0 0.0
      %508 = vmatprep.subr.mxu0 0.0
      %509 = vmatpush1.msra.mxu0 0.0
      %510 = vmatprep.subr.mxu0 0.0
      %511 = vmatpush1.msra.mxu0 0.0
      %512 = vmatprep.subr.mxu0 0.0
      %513 = vmatpush1.msra.mxu0 0.0
      %514 = vmatprep.subr.mxu0 0.0
      %515 = vmatpush1.msra.mxu0 0.0
      %516 = vmatprep.subr.mxu0 0.0
      %517 = vmatpush1.msra.mxu0 0.0
      %518 = vmatprep.subr.mxu0 0.0
      %519 = vmatpush1.msra.mxu0 0.0
      %520 = vmatprep.subr.mxu0 0.0
      %521 = vmatpush1.msra.mxu0 0.0
      %522 = vmatprep.subr.mxu0 0.0
      %523 = vmatpush1.msra.mxu0 0.0
      %524 = vmatprep.subr.mxu0 0.0
      %525 = vmatpush1.msra.mxu0 0.0
      %526 = vmatprep.subr.mxu0 0.0
      %527 = vmatpush1.msra.mxu0 0.0
      %528 = vmatprep.subr.mxu0 0.0
      %529 = vmatpush1.msra.mxu0 0.0
      %530 = vmatprep.subr.mxu0 0.0
      %531 = vmatpush1.msra.mxu0 0.0
      %532 = vmatprep.subr.mxu0 0.0
      %533 = vmatpush1.msra.mxu0 0.0
      %534 = vmatprep.subr.mxu0 0.0
      %535 = vmatpush1.msra.mxu0 0.0
      %536 = vmatprep.subr.mxu0 0.0
      %537 = vmatpush1.msra.mxu0 0.0
      %538 = vmatprep.subr.mxu0 0.0
      %539 = vmatpush1.msra.mxu0 0.0
      %540 = vmatprep.subr.mxu0 0.0
      %541 = vmatpush1.msra.mxu0 0.0
      %542 = vmatprep.subr.mxu0 0.0
      %543 = vmatpush1.msra.mxu0 0.0
      %544 = vmatprep.subr.mxu0 0.0
      %545 = vmatpush1.msra.mxu0 0.0
      %546 = vmatprep.subr.mxu0 0.0
      %547 = vmatpush1.msra.mxu0 0.0
      %548 = vmatprep.subr.mxu0 0.0
      %549 = vmatpush1.msra.mxu0 0.0
      %550 = vmatprep.subr.mxu0 0.0
      %551 = vmatpush1.msra.mxu0 0.0
      %552 = vmatprep.subr.mxu0 0.0
      %553 = vmatpush1.msra.mxu0 0.0
      %554 = vmatprep.subr.mxu0 0.0
      %555 = vmatpush1.msra.mxu0 0.0
      %556 = vmatprep.subr.mxu0 0.0
      %557 = vmatpush1.msra.mxu0 0.0
      %558 = vmatprep.subr.mxu0 0.0
      %559 = vmatpush1.msra.mxu0 0.0
      %560 = vmatprep.mubr.f32.mxu0 0.0
      %561 = vmatmul.mubr.f32.gmra.mrb[0].mxu0 %v494
      %v562 = vpop.f32.mrb[0].mxu0
      %v563 = vadd.f32 0.0, %v562
      %v564 = vpop.f32.mrb[0].mxu0
      %v565 = vadd.f32 0.0, %v564
      %566 = vdwg.mxu0
      %v567 = vadd.f32 %v462, %v563
      %v568 = vadd.f32 %v464, %v565
      %569 = vrot.lane.b32.xlu0 %v298, 112
      %v570 = vpop.permute.xlu0 %569
      %571 = vrot.lane.b32.xlu0 %v299, 112
      %v572 = vpop.permute.xlu0 %571
      %573 = vrot.lane.b32.xlu0 %v300, 112
      %v574 = vpop.permute.xlu0 %573
      %vm575 = vcmask 916480
      %v576 = vsel %vm575, %v570, %v572
      %v577 = vsel %vm575, %v572, %v574
      %v580 = vsel %vm293, %v576, 0.0
      %v581 = vsel %vm294, %v577, 0.0
      %s582 = scalar_lea.vmem %s0, 24
      %v583 = vld [vmem:[%s582] sm:$0xff]
      %v585 = vsel %vm317, %v583, 0
      %587 = vmatprep.subr.mxu0 %v581
      %588 = vmatpush1.msra.mxu0 %v580
      %589 = vmatprep.subr.mxu0 0.0
      %590 = vmatpush1.msra.mxu0 0.0
      %591 = vmatprep.subr.mxu0 0.0
      %592 = vmatpush1.msra.mxu0 0.0
      %593 = vmatprep.subr.mxu0 0.0
      %594 = vmatpush1.msra.mxu0 0.0
      %595 = vmatprep.subr.mxu0 0.0
      %596 = vmatpush1.msra.mxu0 0.0
      %597 = vmatprep.subr.mxu0 0.0
      %598 = vmatpush1.msra.mxu0 0.0
      %599 = vmatprep.subr.mxu0 0.0
      %600 = vmatpush1.msra.mxu0 0.0
      %601 = vmatprep.subr.mxu0 0.0
      %602 = vmatpush1.msra.mxu0 0.0
      %603 = vmatprep.subr.mxu0 0.0
      %604 = vmatpush1.msra.mxu0 0.0
      %605 = vmatprep.subr.mxu0 0.0
      %606 = vmatpush1.msra.mxu0 0.0
      %607 = vmatprep.subr.mxu0 0.0
      %608 = vmatpush1.msra.mxu0 0.0
      %609 = vmatprep.subr.mxu0 0.0
      %610 = vmatpush1.msra.mxu0 0.0
      %611 = vmatprep.subr.mxu0 0.0
      %612 = vmatpush1.msra.mxu0 0.0
      %613 = vmatprep.subr.mxu0 0.0
      %614 = vmatpush1.msra.mxu0 0.0
      %615 = vmatprep.subr.mxu0 0.0
      %616 = vmatpush1.msra.mxu0 0.0
      %617 = vmatprep.subr.mxu0 0.0
      %618 = vmatpush1.msra.mxu0 0.0
      %619 = vmatprep.subr.mxu0 0.0
      %620 = vmatpush1.msra.mxu0 0.0
      %621 = vmatprep.subr.mxu0 0.0
      %622 = vmatpush1.msra.mxu0 0.0
      %623 = vmatprep.subr.mxu0 0.0
      %624 = vmatpush1.msra.mxu0 0.0
      %625 = vmatprep.subr.mxu0 0.0
      %626 = vmatpush1.msra.mxu0 0.0
      %627 = vmatprep.subr.mxu0 0.0
      %628 = vmatpush1.msra.mxu0 0.0
      %629 = vmatprep.subr.mxu0 0.0
      %630 = vmatpush1.msra.mxu0 0.0
      %631 = vmatprep.subr.mxu0 0.0
      %632 = vmatpush1.msra.mxu0 0.0
      %633 = vmatprep.subr.mxu0 0.0
      %634 = vmatpush1.msra.mxu0 0.0
      %635 = vmatprep.subr.mxu0 0.0
      %636 = vmatpush1.msra.mxu0 0.0
      %637 = vmatprep.subr.mxu0 0.0
      %638 = vmatpush1.msra.mxu0 0.0
      %639 = vmatprep.subr.mxu0 0.0
      %640 = vmatpush1.msra.mxu0 0.0
      %641 = vmatprep.subr.mxu0 0.0
      %642 = vmatpush1.msra.mxu0 0.0
      %643 = vmatprep.subr.mxu0 0.0
      %644 = vmatpush1.msra.mxu0 0.0
      %645 = vmatprep.subr.mxu0 0.0
      %646 = vmatpush1.msra.mxu0 0.0
      %647 = vmatprep.subr.mxu0 0.0
      %648 = vmatpush1.msra.mxu0 0.0
      %649 = vmatprep.subr.mxu0 0.0
      %650 = vmatpush1.msra.mxu0 0.0
      %651 = vmatprep.mubr.f32.mxu0 0.0
      %652 = vmatmul.mubr.f32.gmra.mrb[0].mxu0 %v585
      %v653 = vpop.f32.mrb[0].mxu0
      %v654 = vadd.f32 0.0, %v653
      %v655 = vpop.f32.mrb[0].mxu0
      %v656 = vadd.f32 0.0, %v655
      %657 = vdwg.mxu0
      %v658 = vadd.f32 %v567, %v654
      %v659 = vadd.f32 %v568, %v656
      %s660 = scalar_lea.vmem %s0, 32
      %v661 = vld [vmem:[%s660] sm:$0xff]
      %662 = vrot.lane.b32.xlu0 %v298, 111
      %v663 = vpop.permute.xlu0 %662
      %664 = vrot.lane.b32.xlu0 %v299, 111
      %v665 = vpop.permute.xlu0 %664
      %666 = vrot.lane.b32.xlu0 %v300, 111
      %v667 = vpop.permute.xlu0 %666
      %vm668 = vcmask 908288
      %v669 = vsel %vm668, %v663, %v665
      %v670 = vsel %vm668, %v665, %v667
      %v674 = vsel %vm317, %v661, 0
      %676 = vmatprep.subr.mxu0 %v670
      %677 = vmatpush1.msra.mxu0 %v669
      %678 = vmatprep.subr.mxu0 0.0
      %679 = vmatpush1.msra.mxu0 0.0
      %680 = vmatprep.subr.mxu0 0.0
      %681 = vmatpush1.msra.mxu0 0.0
      %682 = vmatprep.subr.mxu0 0.0
      %683 = vmatpush1.msra.mxu0 0.0
      %684 = vmatprep.subr.mxu0 0.0
      %685 = vmatpush1.msra.mxu0 0.0
      %686 = vmatprep.subr.mxu0 0.0
      %687 = vmatpush1.msra.mxu0 0.0
      %688 = vmatprep.subr.mxu0 0.0
      %689 = vmatpush1.msra.mxu0 0.0
      %690 = vmatprep.subr.mxu0 0.0
      %691 = vmatpush1.msra.mxu0 0.0
      %692 = vmatprep.subr.mxu0 0.0
      %693 = vmatpush1.msra.mxu0 0.0
      %694 = vmatprep.subr.mxu0 0.0
      %695 = vmatpush1.msra.mxu0 0.0
      %696 = vmatprep.subr.mxu0 0.0
      %697 = vmatpush1.msra.mxu0 0.0
      %698 = vmatprep.subr.mxu0 0.0
      %699 = vmatpush1.msra.mxu0 0.0
      %700 = vmatprep.subr.mxu0 0.0
      %701 = vmatpush1.msra.mxu0 0.0
      %702 = vmatprep.subr.mxu0 0.0
      %703 = vmatpush1.msra.mxu0 0.0
      %704 = vmatprep.subr.mxu0 0.0
      %705 = vmatpush1.msra.mxu0 0.0
      %706 = vmatprep.subr.mxu0 0.0
      %707 = vmatpush1.msra.mxu0 0.0
      %708 = vmatprep.subr.mxu0 0.0
      %709 = vmatpush1.msra.mxu0 0.0
      %710 = vmatprep.subr.mxu0 0.0
      %711 = vmatpush1.msra.mxu0 0.0
      %712 = vmatprep.subr.mxu0 0.0
      %713 = vmatpush1.msra.mxu0 0.0
      %714 = vmatprep.subr.mxu0 0.0
      %715 = vmatpush1.msra.mxu0 0.0
      %716 = vmatprep.subr.mxu0 0.0
      %717 = vmatpush1.msra.mxu0 0.0
      %718 = vmatprep.subr.mxu0 0.0
      %719 = vmatpush1.msra.mxu0 0.0
      %720 = vmatprep.subr.mxu0 0.0
      %721 = vmatpush1.msra.mxu0 0.0
      %722 = vmatprep.subr.mxu0 0.0
      %723 = vmatpush1.msra.mxu0 0.0
      %724 = vmatprep.subr.mxu0 0.0
      %725 = vmatpush1.msra.mxu0 0.0
      %726 = vmatprep.subr.mxu0 0.0
      %727 = vmatpush1.msra.mxu0 0.0
      %728 = vmatprep.subr.mxu0 0.0
      %729 = vmatpush1.msra.mxu0 0.0
      %730 = vmatprep.subr.mxu0 0.0
      %731 = vmatpush1.msra.mxu0 0.0
      %732 = vmatprep.subr.mxu0 0.0
      %733 = vmatpush1.msra.mxu0 0.0
      %734 = vmatprep.subr.mxu0 0.0
      %735 = vmatpush1.msra.mxu0 0.0
      %736 = vmatprep.subr.mxu0 0.0
      %737 = vmatpush1.msra.mxu0 0.0
      %738 = vmatprep.subr.mxu0 0.0
      %739 = vmatpush1.msra.mxu0 0.0
      %740 = vmatprep.mubr.f32.mxu0 0.0
      %741 = vmatmul.mubr.f32.gmra.mrb[0].mxu0 %v674
      %v742 = vpop.f32.mrb[0].mxu0
      %v743 = vadd.f32 0.0, %v742
      %v744 = vpop.f32.mrb[0].mxu0
      %v745 = vadd.f32 0.0, %v744
      %746 = vdwg.mxu0
      %v747 = vadd.f32 %v658, %v743
      %v748 = vadd.f32 %v659, %v745
      %749 = vrot.lane.b32.xlu0 %v298, 110
      %v750 = vpop.permute.xlu0 %749
      %751 = vrot.lane.b32.xlu0 %v299, 110
      %v752 = vpop.permute.xlu0 %751
      %753 = vrot.lane.b32.xlu0 %v300, 110
      %v754 = vpop.permute.xlu0 %753
      %vm755 = vcmask 900096
      %v756 = vsel %vm755, %v750, %v752
      %v757 = vsel %vm755, %v752, %v754
      %v760 = vsel %vm476, %v756, 0.0
      %v761 = vsel %vm477, %v757, 0.0
      %s762 = scalar_lea.vmem %s0, 40
      %v763 = vld [vmem:[%s762] sm:$0xff]
      %v765 = vsel %vm317, %v763, 0
      %767 = vmatprep.subr.mxu0 %v761
      %768 = vmatpush1.msra.mxu0 %v760
      %769 = vmatprep.subr.mxu0 0.0
      %770 = vmatpush1.msra.mxu0 0.0
      %771 = vmatprep.subr.mxu0 0.0
      %772 = vmatpush1.msra.mxu0 0.0
      %773 = vmatprep.subr.mxu0 0.0
      %774 = vmatpush1.msra.mxu0 0.0
      %775 = vmatprep.subr.mxu0 0.0
      %776 = vmatpush1.msra.mxu0 0.0
      %777 = vmatprep.subr.mxu0 0.0
      %778 = vmatpush1.msra.mxu0 0.0
      %779 = vmatprep.subr.mxu0 0.0
      %780 = vmatpush1.msra.mxu0 0.0
      %781 = vmatprep.subr.mxu0 0.0
      %782 = vmatpush1.msra.mxu0 0.0
      %783 = vmatprep.subr.mxu0 0.0
      %784 = vmatpush1.msra.mxu0 0.0
      %785 = vmatprep.subr.mxu0 0.0
      %786 = vmatpush1.msra.mxu0 0.0
      %787 = vmatprep.subr.mxu0 0.0
      %788 = vmatpush1.msra.mxu0 0.0
      %789 = vmatprep.subr.mxu0 0.0
      %790 = vmatpush1.msra.mxu0 0.0
      %791 = vmatprep.subr.mxu0 0.0
      %792 = vmatpush1.msra.mxu0 0.0
      %793 = vmatprep.subr.mxu0 0.0
      %794 = vmatpush1.msra.mxu0 0.0
      %795 = vmatprep.subr.mxu0 0.0
      %796 = vmatpush1.msra.mxu0 0.0
      %797 = vmatprep.subr.mxu0 0.0
      %798 = vmatpush1.msra.mxu0 0.0
      %799 = vmatprep.subr.mxu0 0.0
      %800 = vmatpush1.msra.mxu0 0.0
      %801 = vmatprep.subr.mxu0 0.0
      %802 = vmatpush1.msra.mxu0 0.0
      %803 = vmatprep.subr.mxu0 0.0
      %804 = vmatpush1.msra.mxu0 0.0
      %805 = vmatprep.subr.mxu0 0.0
      %806 = vmatpush1.msra.mxu0 0.0
      %807 = vmatprep.subr.mxu0 0.0
      %808 = vmatpush1.msra.mxu0 0.0
      %809 = vmatprep.subr.mxu0 0.0
      %810 = vmatpush1.msra.mxu0 0.0
      %811 = vmatprep.subr.mxu0 0.0
      %812 = vmatpush1.msra.mxu0 0.0
      %813 = vmatprep.subr.mxu0 0.0
      %814 = vmatpush1.msra.mxu0 0.0
      %815 = vmatprep.subr.mxu0 0.0
      %816 = vmatpush1.msra.mxu0 0.0
      %817 = vmatprep.subr.mxu0 0.0
      %818 = vmatpush1.msra.mxu0 0.0
      %819 = vmatprep.subr.mxu0 0.0
      %820 = vmatpush1.msra.mxu0 0.0
      %821 = vmatprep.subr.mxu0 0.0
      %822 = vmatpush1.msra.mxu0 0.0
      %823 = vmatprep.subr.mxu0 0.0
      %824 = vmatpush1.msra.mxu0 0.0
      %825 = vmatprep.subr.mxu0 0.0
      %826 = vmatpush1.msra.mxu0 0.0
      %827 = vmatprep.subr.mxu0 0.0
      %828 = vmatpush1.msra.mxu0 0.0
      %829 = vmatprep.subr.mxu0 0.0
      %830 = vmatpush1.msra.mxu0 0.0
      %831 = vmatprep.mubr.f32.mxu0 0.0
      %832 = vmatmul.mubr.f32.gmra.mrb[0].mxu0 %v765
      %v833 = vpop.f32.mrb[0].mxu0
      %v834 = vadd.f32 0.0, %v833
      %v835 = vpop.f32.mrb[0].mxu0
      %v836 = vadd.f32 0.0, %v835
      %837 = vdwg.mxu0
      %v838 = vadd.f32 %v747, %v834
      %v839 = vadd.f32 %v748, %v836
      %840 = vrot.lane.b32.xlu0 %v298, 96
      %v841 = vpop.permute.xlu0 %840
      %842 = vrot.lane.b32.xlu0 %v299, 96
      %v843 = vpop.permute.xlu0 %842
      %844 = vrot.lane.b32.xlu0 %v300, 96
      %v845 = vpop.permute.xlu0 %844
      %vm846 = vcmask 785408
      %v847 = vsel %vm846, %v841, %v843
      %v848 = vsel %vm846, %v843, %v845
      %v851 = vsel %vm293, %v847, 0.0
      %v852 = vsel %vm294, %v848, 0.0
      %s853 = scalar_lea.vmem %s0, 48
      %v854 = vld [vmem:[%s853] sm:$0xff]
      %v856 = vsel %vm317, %v854, 0
      %858 = vmatprep.subr.mxu0 %v852
      %859 = vmatpush1.msra.mxu0 %v851
      %860 = vmatprep.subr.mxu0 0.0
      %861 = vmatpush1.msra.mxu0 0.0
      %862 = vmatprep.subr.mxu0 0.0
      %863 = vmatpush1.msra.mxu0 0.0
      %864 = vmatprep.subr.mxu0 0.0
      %865 = vmatpush1.msra.mxu0 0.0
      %866 = vmatprep.subr.mxu0 0.0
      %867 = vmatpush1.msra.mxu0 0.0
      %868 = vmatprep.subr.mxu0 0.0
      %869 = vmatpush1.msra.mxu0 0.0
      %870 = vmatprep.subr.mxu0 0.0
      %871 = vmatpush1.msra.mxu0 0.0
      %872 = vmatprep.subr.mxu0 0.0
      %873 = vmatpush1.msra.mxu0 0.0
      %874 = vmatprep.subr.mxu0 0.0
      %875 = vmatpush1.msra.mxu0 0.0
      %876 = vmatprep.subr.mxu0 0.0
      %877 = vmatpush1.msra.mxu0 0.0
      %878 = vmatprep.subr.mxu0 0.0
      %879 = vmatpush1.msra.mxu0 0.0
      %880 = vmatprep.subr.mxu0 0.0
      %881 = vmatpush1.msra.mxu0 0.0
      %882 = vmatprep.subr.mxu0 0.0
      %883 = vmatpush1.msra.mxu0 0.0
      %884 = vmatprep.subr.mxu0 0.0
      %885 = vmatpush1.msra.mxu0 0.0
      %886 = vmatprep.subr.mxu0 0.0
      %887 = vmatpush1.msra.mxu0 0.0
      %888 = vmatprep.subr.mxu0 0.0
      %889 = vmatpush1.msra.mxu0 0.0
      %890 = vmatprep.subr.mxu0 0.0
      %891 = vmatpush1.msra.mxu0 0.0
      %892 = vmatprep.subr.mxu0 0.0
      %893 = vmatpush1.msra.mxu0 0.0
      %894 = vmatprep.subr.mxu0 0.0
      %895 = vmatpush1.msra.mxu0 0.0
      %896 = vmatprep.subr.mxu0 0.0
      %897 = vmatpush1.msra.mxu0 0.0
      %898 = vmatprep.subr.mxu0 0.0
      %899 = vmatpush1.msra.mxu0 0.0
      %900 = vmatprep.subr.mxu0 0.0
      %901 = vmatpush1.msra.mxu0 0.0
      %902 = vmatprep.subr.mxu0 0.0
      %903 = vmatpush1.msra.mxu0 0.0
      %904 = vmatprep.subr.mxu0 0.0
      %905 = vmatpush1.msra.mxu0 0.0
      %906 = vmatprep.subr.mxu0 0.0
      %907 = vmatpush1.msra.mxu0 0.0
      %908 = vmatprep.subr.mxu0 0.0
      %909 = vmatpush1.msra.mxu0 0.0
      %910 = vmatprep.subr.mxu0 0.0
      %911 = vmatpush1.msra.mxu0 0.0
      %912 = vmatprep.subr.mxu0 0.0
      %913 = vmatpush1.msra.mxu0 0.0
      %914 = vmatprep.subr.mxu0 0.0
      %915 = vmatpush1.msra.mxu0 0.0
      %916 = vmatprep.subr.mxu0 0.0
      %917 = vmatpush1.msra.mxu0 0.0
      %918 = vmatprep.subr.mxu0 0.0
      %919 = vmatpush1.msra.mxu0 0.0
      %920 = vmatprep.subr.mxu0 0.0
      %921 = vmatpush1.msra.mxu0 0.0
      %922 = vmatprep.mubr.f32.mxu0 0.0
      %923 = vmatmul.mubr.f32.gmra.mrb[0].mxu0 %v856
      %v924 = vpop.f32.mrb[0].mxu0
      %v925 = vadd.f32 0.0, %v924
      %v926 = vpop.f32.mrb[0].mxu0
      %v927 = vadd.f32 0.0, %v926
      %928 = vdwg.mxu0
      %v929 = vadd.f32 %v838, %v925
      %v930 = vadd.f32 %v839, %v927
      %s931 = scalar_lea.vmem %s0, 56
      %v932 = vld [vmem:[%s931] sm:$0xff]
      %933 = vrot.lane.b32.xlu0 %v298, 95
      %v934 = vpop.permute.xlu0 %933
      %935 = vrot.lane.b32.xlu0 %v299, 95
      %v936 = vpop.permute.xlu0 %935
      %937 = vrot.lane.b32.xlu0 %v300, 95
      %v938 = vpop.permute.xlu0 %937
      %vm939 = vcmask 777216
      %v940 = vsel %vm939, %v934, %v936
      %v941 = vsel %vm939, %v936, %v938
      %v945 = vsel %vm317, %v932, 0
      %947 = vmatprep.subr.mxu0 %v941
      %948 = vmatpush1.msra.mxu0 %v940
      %949 = vmatprep.subr.mxu0 0.0
      %950 = vmatpush1.msra.mxu0 0.0
      %951 = vmatprep.subr.mxu0 0.0
      %952 = vmatpush1.msra.mxu0 0.0
      %953 = vmatprep.subr.mxu0 0.0
      %954 = vmatpush1.msra.mxu0 0.0
      %955 = vmatprep.subr.mxu0 0.0
      %956 = vmatpush1.msra.mxu0 0.0
      %957 = vmatprep.subr.mxu0 0.0
      %958 = vmatpush1.msra.mxu0 0.0
      %959 = vmatprep.subr.mxu0 0.0
      %960 = vmatpush1.msra.mxu0 0.0
      %961 = vmatprep.subr.mxu0 0.0
      %962 = vmatpush1.msra.mxu0 0.0
      %963 = vmatprep.subr.mxu0 0.0
      %964 = vmatpush1.msra.mxu0 0.0
      %965 = vmatprep.subr.mxu0 0.0
      %966 = vmatpush1.msra.mxu0 0.0
      %967 = vmatprep.subr.mxu0 0.0
      %968 = vmatpush1.msra.mxu0 0.0
      %969 = vmatprep.subr.mxu0 0.0
      %970 = vmatpush1.msra.mxu0 0.0
      %971 = vmatprep.subr.mxu0 0.0
      %972 = vmatpush1.msra.mxu0 0.0
      %973 = vmatprep.subr.mxu0 0.0
      %974 = vmatpush1.msra.mxu0 0.0
      %975 = vmatprep.subr.mxu0 0.0
      %976 = vmatpush1.msra.mxu0 0.0
      %977 = vmatprep.subr.mxu0 0.0
      %978 = vmatpush1.msra.mxu0 0.0
      %979 = vmatprep.subr.mxu0 0.0
      %980 = vmatpush1.msra.mxu0 0.0
      %981 = vmatprep.subr.mxu0 0.0
      %982 = vmatpush1.msra.mxu0 0.0
      %983 = vmatprep.subr.mxu0 0.0
      %984 = vmatpush1.msra.mxu0 0.0
      %985 = vmatprep.subr.mxu0 0.0
      %986 = vmatpush1.msra.mxu0 0.0
      %987 = vmatprep.subr.mxu0 0.0
      %988 = vmatpush1.msra.mxu0 0.0
      %989 = vmatprep.subr.mxu0 0.0
      %990 = vmatpush1.msra.mxu0 0.0
      %991 = vmatprep.subr.mxu0 0.0
      %992 = vmatpush1.msra.mxu0 0.0
      %993 = vmatprep.subr.mxu0 0.0
      %994 = vmatpush1.msra.mxu0 0.0
      %995 = vmatprep.subr.mxu0 0.0
      %996 = vmatpush1.msra.mxu0 0.0
      %997 = vmatprep.subr.mxu0 0.0
      %998 = vmatpush1.msra.mxu0 0.0
      %999 = vmatprep.subr.mxu0 0.0
      %1000 = vmatpush1.msra.mxu0 0.0
      %1001 = vmatprep.subr.mxu0 0.0
      %1002 = vmatpush1.msra.mxu0 0.0
      %1003 = vmatprep.subr.mxu0 0.0
      %1004 = vmatpush1.msra.mxu0 0.0
      %1005 = vmatprep.subr.mxu0 0.0
      %1006 = vmatpush1.msra.mxu0 0.0
      %1007 = vmatprep.subr.mxu0 0.0
      %1008 = vmatpush1.msra.mxu0 0.0
      %1009 = vmatprep.subr.mxu0 0.0
      %1010 = vmatpush1.msra.mxu0 0.0
      %1011 = vmatprep.mubr.f32.mxu0 0.0
      %1012 = vmatmul.mubr.f32.gmra.mrb[0].mxu0 %v945
      %v1013 = vpop.f32.mrb[0].mxu0
      %v1014 = vadd.f32 0.0, %v1013
      %v1015 = vpop.f32.mrb[0].mxu0
      %v1016 = vadd.f32 0.0, %v1015
      %1017 = vdwg.mxu0
      %v1018 = vadd.f32 %v929, %v1014
      %v1019 = vadd.f32 %v930, %v1016
      %1020 = vrot.lane.b32.xlu0 %v298, 94
      %v1021 = vpop.permute.xlu0 %1020
      %1022 = vrot.lane.b32.xlu0 %v299, 94
      %v1023 = vpop.permute.xlu0 %1022
      %1024 = vrot.lane.b32.xlu0 %v300, 94
      %v1025 = vpop.permute.xlu0 %1024
      %vm1026 = vcmask 769024
      %v1027 = vsel %vm1026, %v1021, %v1023
      %v1028 = vsel %vm1026, %v1023, %v1025
      %v1031 = vsel %vm476, %v1027, 0.0
      %v1032 = vsel %vm477, %v1028, 0.0
      %s1033 = scalar_lea.vmem %s0, 64
      %v1034 = vld [vmem:[%s1033] sm:$0xff]
      %v1036 = vsel %vm317, %v1034, 0
      %1038 = vmatprep.subr.mxu0 %v1032
      %1039 = vmatpush1.msra.mxu0 %v1031
      %1040 = vmatprep.subr.mxu0 0.0
      %1041 = vmatpush1.msra.mxu0 0.0
      %1042 = vmatprep.subr.mxu0 0.0
      %1043 = vmatpush1.msra.mxu0 0.0
      %1044 = vmatprep.subr.mxu0 0.0
      %1045 = vmatpush1.msra.mxu0 0.0
      %1046 = vmatprep.subr.mxu0 0.0
      %1047 = vmatpush1.msra.mxu0 0.0
      %1048 = vmatprep.subr.mxu0 0.0
      %1049 = vmatpush1.msra.mxu0 0.0
      %1050 = vmatprep.subr.mxu0 0.0
      %1051 = vmatpush1.msra.mxu0 0.0
      %1052 = vmatprep.subr.mxu0 0.0
      %1053 = vmatpush1.msra.mxu0 0.0
      %1054 = vmatprep.subr.mxu0 0.0
      %1055 = vmatpush1.msra.mxu0 0.0
      %1056 = vmatprep.subr.mxu0 0.0
      %1057 = vmatpush1.msra.mxu0 0.0
      %1058 = vmatprep.subr.mxu0 0.0
      %1059 = vmatpush1.msra.mxu0 0.0
      %1060 = vmatprep.subr.mxu0 0.0
      %1061 = vmatpush1.msra.mxu0 0.0
      %1062 = vmatprep.subr.mxu0 0.0
      %1063 = vmatpush1.msra.mxu0 0.0
      %1064 = vmatprep.subr.mxu0 0.0
      %1065 = vmatpush1.msra.mxu0 0.0
      %1066 = vmatprep.subr.mxu0 0.0
      %1067 = vmatpush1.msra.mxu0 0.0
      %1068 = vmatprep.subr.mxu0 0.0
      %1069 = vmatpush1.msra.mxu0 0.0
      %1070 = vmatprep.subr.mxu0 0.0
      %1071 = vmatpush1.msra.mxu0 0.0
      %1072 = vmatprep.subr.mxu0 0.0
      %1073 = vmatpush1.msra.mxu0 0.0
      %1074 = vmatprep.subr.mxu0 0.0
      %1075 = vmatpush1.msra.mxu0 0.0
      %1076 = vmatprep.subr.mxu0 0.0
      %1077 = vmatpush1.msra.mxu0 0.0
      %1078 = vmatprep.subr.mxu0 0.0
      %1079 = vmatpush1.msra.mxu0 0.0
      %1080 = vmatprep.subr.mxu0 0.0
      %1081 = vmatpush1.msra.mxu0 0.0
      %1082 = vmatprep.subr.mxu0 0.0
      %1083 = vmatpush1.msra.mxu0 0.0
      %1084 = vmatprep.subr.mxu0 0.0
      %1085 = vmatpush1.msra.mxu0 0.0
      %1086 = vmatprep.subr.mxu0 0.0
      %1087 = vmatpush1.msra.mxu0 0.0
      %1088 = vmatprep.subr.mxu0 0.0
      %1089 = vmatpush1.msra.mxu0 0.0
      %1090 = vmatprep.subr.mxu0 0.0
      %1091 = vmatpush1.msra.mxu0 0.0
      %1092 = vmatprep.subr.mxu0 0.0
      %1093 = vmatpush1.msra.mxu0 0.0
      %1094 = vmatprep.subr.mxu0 0.0
      %1095 = vmatpush1.msra.mxu0 0.0
      %1096 = vmatprep.subr.mxu0 0.0
      %1097 = vmatpush1.msra.mxu0 0.0
      %1098 = vmatprep.subr.mxu0 0.0
      %1099 = vmatpush1.msra.mxu0 0.0
      %1100 = vmatprep.subr.mxu0 0.0
      %1101 = vmatpush1.msra.mxu0 0.0
      %1102 = vmatprep.mubr.f32.mxu0 0.0
      %1103 = vmatmul.mubr.f32.gmra.mrb[0].mxu0 %v1036
      %v1104 = vpop.f32.mrb[0].mxu0
      %v1105 = vadd.f32 0.0, %v1104
      %v1106 = vpop.f32.mrb[0].mxu0
      %v1107 = vadd.f32 0.0, %v1106
      %1108 = vdwg.mxu0
      %v1109 = vadd.f32 %v1018, %v1105
      %v1110 = vadd.f32 %v1019, %v1107
      %v1111 = vld [vmem:[%s1] sm:$0xff]
      %1113 = vset.pattern.permute.xlu0 0
      %1114 = vperm.xlu0 %1113, %v1111
      %v1115 = vpop.permute.xlu0 %1114
      %v1117 = vadd.f32 %v1109, %v1115
      %v1118 = vadd.f32 %v1110, %v1115
      %1119 = vst [vmem:[%s245] sm:$0xff] %v1117
      %1120 = vst [vmem:[%s245 + $0x8] sm:$0xff] %v1118
      %v1121 = vadd.f32 %v1117, %v1118
      %1122 = vadd.xlane.f32.xlu0 %v1121
      %v1123 = vpop.xlane.xlu0 %1122
      %vm1124 = vcmask 7168
      %1125 = vst.msk [vmem:[%s253] sm:$0xff] %vm1124, %v1123
      %v1126 = vmul.f32 %v1117, %v1117
      %v1127 = vmul.f32 %v1118, %v1118
      %v1128 = vadd.f32 %v1126, %v1127
      %1129 = vadd.xlane.f32.xlu0 %v1128
      %v1130 = vpop.xlane.xlu0 %1129
      %vm1131 = vcmask 15368
      %1132 = vst.msk [vmem:[%s253] sm:$0xff] %vm1131, %v1130
      %s1133 = smul.u32 2, %s21
      %p1134 = scmp.lt.s32.totalorder %s20, 1
      %s1135 = scalar_select %p1134, %s20, 1
      %p1136 = scmp.lt.s32.totalorder %s1133, 1
      %s1137 = scalar_select %p1136, %s1133, 1
      %s1138 = smul.addr %s1135, 2
      %s1139 = sadd.s32 %s1137, %s1138
      %s1140 = smul.addr %s1139, 8
      %s1141 = scalar_lea.vmem %s3, %s1140
      %p1142 = scmp.lt.s32.totalorder %s20, 1
      %s1143 = scalar_select %p1142, %s20, 1
      %p1144 = scmp.lt.s32.totalorder %s21, 0
      %s1145 = scalar_select %p1144, %s21, 0
      %s1146 = sadd.s32 %s1145, %s1143
      %s1147 = smul.addr %s1146, 8
      %s1148 = scalar_lea.vmem %s4, %s1147
      // Predicated region
      $region33: #{gfixed_layer2_forward.3} parent=31 // pred_check
        %p1149 = pneg %p118
      $region34: #{gfixed_layer2_forward.3} parent=31 // pred_check_branch
        %1151 = sbr.rel (%p1149) target = $region36
      $region35: #{gfixed_layer2_forward.3} parent=31 // pred_region
        %s1152 = smul.u32 2, %s21
      $region36: #{gfixed_layer2_forward.3} parent=31 // pred_fallthru
        _
      // Predicated region
      $region37: #{gfixed_layer2_forward.3} parent=31 // pred_check
        %p1153 = pneg %p146
      $region38: #{gfixed_layer2_forward.3} parent=31 // pred_check_branch
        %1155 = sbr.rel (%p1153) target = $region40
      $region39: #{gfixed_layer2_forward.3} parent=31 // pred_region
        _
      $region40: #{gfixed_layer2_forward.3} parent=31 // pred_fallthru
        _
    $region32: #{gfixed_layer2_forward.3} parent=5 // pred_fallthru
      _
    %p1156 = scmp.le.s32.totalorder 2, %s11
    // Predicated region
    $region41: #{gfixed_layer2_forward.3} parent=5 // pred_check
      %p1157 = pneg %p1156
    $region42: #{gfixed_layer2_forward.3} parent=5 // pred_check_branch
      %1159 = sbr.rel (%p1157) target = $region44
    $region43: #{gfixed_layer2_forward.3} parent=5 // pred_region
      %s1160 = ssub.s32 %s11, 2
      // Predicated region
      $region45: #{gfixed_layer2_forward.3} parent=43 // pred_check
        %p1161 = pneg %p124
      $region46: #{gfixed_layer2_forward.3} parent=43 // pred_check_branch
        %1163 = sbr.rel (%p1161) target = $region48
      $region47: #{gfixed_layer2_forward.3} parent=43 // pred_region
        %s1164 = smul.u32 2, %s23
        %p1165 = scmp.lt.s32.totalorder %s22, 1
        %s1166 = scalar_select %p1165, %s22, 1
        %p1167 = scmp.lt.s32.totalorder %s1164, 1
        %s1168 = scalar_select %p1167, %s1164, 1
        %s1169 = smul.addr %s1166, 2
        %s1170 = sadd.s32 %s1168, %s1169
        %s1171 = smul.addr %s1170, 8
        %s1172 = scalar_lea.vmem %s3, %s1171
      $region48: #{gfixed_layer2_forward.3} parent=43 // pred_fallthru
        _
      // Predicated region
      $region49: #{gfixed_layer2_forward.3} parent=43 // pred_check
        %p1173 = pneg %p152
      $region50: #{gfixed_layer2_forward.3} parent=43 // pred_check_branch
        %1175 = sbr.rel (%p1173) target = $region52
      $region51: #{gfixed_layer2_forward.3} parent=43 // pred_region
        %p1176 = scmp.lt.s32.totalorder %s22, 1
        %s1177 = scalar_select %p1176, %s22, 1
        %p1178 = scmp.lt.s32.totalorder %s23, 0
        %s1179 = scalar_select %p1178, %s23, 0
        %s1180 = sadd.s32 %s1179, %s1177
        %s1181 = smul.addr %s1180, 8
        %s1182 = scalar_lea.vmem %s4, %s1181
      $region52: #{gfixed_layer2_forward.3} parent=43 // pred_fallthru
        _
    $region44: #{gfixed_layer2_forward.3} parent=5 // pred_fallthru
      _
  $region6: #{gfixed_layer2_forward.3} parent=0 // loop_footer
    %s15 = sadd.s32 1, %s11
  $region7: #{gfixed_layer2_forward.3} parent=0 // loop_footer_branch
    %10 = sbr.rel target = $region3
  $region8: #{gfixed_layer2_forward.3} parent=0 // loop_exit
    _

</llo_original>
